<compile_context>
chip_gen: v7x
topology: tpu7x:2x2x1
jax: 0.10.0
libtpu: 0.0.40
codegen_flags: <defaults>
</compile_context>

<pallas_src>
import functools
import math

import jax
import jax.numpy as jnp
from jax.experimental import pallas as pl
from jax.experimental.pallas import tpu as pltpu


# ----------------------------------------------------------------------------
# Kernel (transposed layout: y = W @ x + b, activations are (feat, TB))
# ----------------------------------------------------------------------------
def double_critic_kernel(x_ref,                       # (state_dim+action_dim, TB)
                         ws1_ref, ws2_ref,            # (H, state_dim), (H, H)
                         wq1_ref, wq2_ref, wq3_ref,   # (H, H+ad), (H, H), (H, H)
                         wq4_ref,                     # (1, H)
                         b_ref,                       # (H, 6) packed bias columns
                         out_ref,                     # (1, TB)
                         *, state_dim, hidden_dim):
    f32 = jnp.float32
    H = hidden_dim

    # Split the packed input slab (static sublane slices, zero-cost views).
    s = x_ref[0:state_dim, :].astype(f32)            # (state_dim, TB)
    a = x_ref[state_dim:, :].astype(f32)             # (action_dim, TB)

    # Packed biases: columns 0..4 are H-wide, column 5 row 0 is q4's scalar.
    bs1 = b_ref[:, 0:1]
    bs2 = b_ref[:, 1:2]
    bq1 = b_ref[:, 2:3]
    bq2 = b_ref[:, 3:4]
    bq3 = b_ref[:, 4:5]
    bq4 = b_ref[0:1, 5:6]

    # ---- state_mlp: Linear -> Tanh -> Linear ----
    h = jnp.tanh(jnp.dot(ws1_ref[...], s, preferred_element_type=f32) + bs1)
    ps = jnp.dot(ws2_ref[...], h, preferred_element_type=f32) + bs2   # (H, TB)

    # ---- q1_net layer 1: concat replaced by two accumulated dots ----
    wq1_s = wq1_ref[:, 0:H]        # (H, H)          static slice of resident ref
    wq1_a = wq1_ref[:, H:]         # (H, action_dim)
    q = jnp.tanh(jnp.dot(wq1_s, ps, preferred_element_type=f32)
                 + jnp.dot(wq1_a, a, preferred_element_type=f32) + bq1)

    # ---- q1_net layers 2..4 ----
    q = jnp.tanh(jnp.dot(wq2_ref[...], q, preferred_element_type=f32) + bq2)
    q = jnp.tanh(jnp.dot(wq3_ref[...], q, preferred_element_type=f32) + bq3)
    q = jnp.dot(wq4_ref[...], q, preferred_element_type=f32) + bq4    # (1, TB)

    out_ref[...] = q.astype(out_ref.dtype)            # lane-dense full vst


# ----------------------------------------------------------------------------
# Parameters (PyTorch Linear init; weights kept in native (out, in) form;
# biases packed once into a (H, 6) column slab).
# ----------------------------------------------------------------------------
def init_params(key, state_dim, action_dim, hidden_dim):
    H = hidden_dim
    layer_specs = [("s1", state_dim, H), ("s2", H, H),
                   ("q1", H + action_dim, H), ("q2", H, H),
                   ("q3", H, H), ("q4", H, 1)]
    params = {}
    keys = jax.random.split(key, len(layer_specs))
    for k, (name, fan_in, fan_out) in zip(keys, layer_specs):
        kw, kb = jax.random.split(k)
        bound = 1.0 / math.sqrt(fan_in)
        params[f"{name}_w"] = jax.random.uniform(
            kw, (fan_out, fan_in), jnp.float32, -bound, bound)   # PyTorch (out, in)
        params[f"{name}_b"] = jax.random.uniform(
            kb, (fan_out,), jnp.float32, -bound, bound)

    b_pack = jnp.zeros((H, 6), jnp.float32)
    b_pack = b_pack.at[:, 0].set(params["s1_b"])
    b_pack = b_pack.at[:, 1].set(params["s2_b"])
    b_pack = b_pack.at[:, 2].set(params["q1_b"])
    b_pack = b_pack.at[:, 3].set(params["q2_b"])
    b_pack = b_pack.at[:, 4].set(params["q3_b"])
    b_pack = b_pack.at[0, 5].set(params["q4_b"][0])
    params["b_pack"] = b_pack
    return params


# ----------------------------------------------------------------------------
# Wrapper
# ----------------------------------------------------------------------------
def _batch_tiling(B, block_b):
    """Pick (TB, Bp). The batch is the lane (last) axis, so tiles must be
    multiples of 128 unless a single full-batch block is used (always legal)."""
    assert block_b % 128 == 0
    if B <= block_b:
        if B % 256 == 0:
            # >= 2 lane-aligned tiles (no padding) so the "parallel" batch axis
            # can shard across the two TensorCores on v7x.
            return B // 2, B
        return B, B            # single full-batch block: no pad, no final slice
    TB = block_b
    return TB, pl.cdiv(B, TB) * TB


def double_critic_forward(state, action, params, *, block_b=2048):
    """q1 = q1_net(cat([state_mlp(state), action], -1)); returns (B, 1)."""
    B, state_dim = state.shape
    action_dim = action.shape[1]
    H = params["s2_w"].shape[0]          # (out, in) form -> out dim
    feat = state_dim + action_dim

    # One packed (feat, B) input slab: a single DMA per grid step, batch on the
    # 128-lane axis so every in-kernel activation is lane-dense.
    x = jnp.concatenate([state.astype(jnp.float32),
                         action.astype(jnp.float32)], axis=-1).T   # (feat, B)

    TB, Bp = _batch_tiling(B, block_b)
    if Bp != B:                          # padded columns produce finite garbage
        x = jnp.pad(x, ((0, 0), (0, Bp - B)))   # that is sliced off below

    grid = (Bp // TB,)
    resident = lambda shape: pl.BlockSpec(shape, lambda i: (0, 0))
    kernel = functools.partial(double_critic_kernel,
                               state_dim=state_dim, hidden_dim=H)

    out = pl.pallas_call(
        kernel,
        out_shape=jax.ShapeDtypeStruct((1, Bp), jnp.float32),
        grid_spec=pltpu.PrefetchScalarGridSpec(
            num_scalar_prefetch=0,
            grid=grid,
            in_specs=[
                pl.BlockSpec((feat, TB), lambda i: (0, i)),   # packed input tile
                resident((H, state_dim)),                     # ws1
                resident((H, H)),                             # ws2
                resident((H, H + action_dim)),                # wq1
                resident((H, H)),                             # wq2
                resident((H, H)),                             # wq3
                resident((1, H)),                             # wq4
                resident((H, 6)),                             # packed biases
            ],
            out_specs=pl.BlockSpec((1, TB), lambda i: (0, i)),
        ),
        compiler_params=pltpu.CompilerParams(
            dimension_semantics=("parallel",),        # megacore sharding on v7x
            vmem_limit_bytes=32 * 1024 * 1024,        # fits v5e/v6e/v7x scoped VMEM
        ),
    )(x, params["s1_w"], params["s2_w"],
      params["q1_w"], params["q2_w"], params["q3_w"], params["q4_w"],
      params["b_pack"])

    return out[0, :B, None]              # (B, 1)


# ----------------------------------------------------------------------------
# Pure-JAX reference (mirrors the PyTorch forward exactly)
# ----------------------------------------------------------------------------
def double_critic_reference(state, action, params):
    s = state.astype(jnp.float32)
    a = action.astype(jnp.float32)
    h = jnp.tanh(s @ params["s1_w"].T + params["s1_b"])
    processed_state = h @ params["s2_w"].T + params["s2_b"]
    x = jnp.concatenate([processed_state, a], axis=-1)
    q = jnp.tanh(x @ params["q1_w"].T + params["q1_b"])
    q = jnp.tanh(q @ params["q2_w"].T + params["q2_b"])
    q = jnp.tanh(q @ params["q3_w"].T + params["q3_b"])
    return q @ params["q4_w"].T + params["q4_b"]


if __name__ == "__main__":
    # Small shapes consistent with the module's forward.
    B, state_dim, action_dim, hidden_dim = 300, 16, 4, 32

    key = jax.random.PRNGKey(0)
    k_p, k_s, k_a = jax.random.split(key, 3)

    params = init_params(k_p, state_dim, action_dim, hidden_dim)
    state = jax.random.normal(k_s, (B, state_dim), jnp.float32)
    action = jax.random.normal(k_a, (B, action_dim), jnp.float32)

    ref = double_critic_reference(state, action, params)

    # 1) Ragged batch, default fat tile -> single full-batch block, no padding.
    out = jax.block_until_ready(double_critic_forward(state, action, params))
    assert out.shape == (B, 1)
    assert jnp.allclose(out, ref, atol=1e-5, rtol=1e-5), "mismatch (single block)"

    # 2) Tiled + padded path: B=300 with 128-wide lane tiles -> 3 grid steps.
    out_t = jax.block_until_ready(
        double_critic_forward(state, action, params, block_b=128))
    assert out_t.shape == (B, 1)
    assert jnp.allclose(out_t, ref, atol=1e-5, rtol=1e-5), "mismatch (tiled/padded)"

    # 3) Megacore split path: B=256 -> two 128-lane tiles, no padding.
    Bm = 256
    out_m = jax.block_until_ready(
        double_critic_forward(state[:Bm], action[:Bm], params))
    assert out_m.shape == (Bm, 1)
    assert jnp.allclose(out_m, ref[:Bm], atol=1e-5, rtol=1e-5), "mismatch (2-tile)"

    print("KERNEL_OK")
</pallas_src>

<mosaic_0001>
module attributes {stable_mosaic.version = 11 : i64} {
  func.func @double_critic_kernel(%arg0: i32, %arg1: memref<20x300xf32, #tpu.memory_space<vmem>>, %arg2: memref<32x16xf32, #tpu.memory_space<vmem>>, %arg3: memref<32x32xf32, #tpu.memory_space<vmem>>, %arg4: memref<32x36xf32, #tpu.memory_space<vmem>>, %arg5: memref<32x32xf32, #tpu.memory_space<vmem>>, %arg6: memref<32x32xf32, #tpu.memory_space<vmem>>, %arg7: memref<1x32xf32, #tpu.memory_space<vmem>>, %arg8: memref<32x6xf32, #tpu.memory_space<vmem>>, %arg9: memref<1x300xf32, #tpu.memory_space<vmem>>) attributes {dimension_semantics = [#tpu.dimension_semantics<parallel>], iteration_bounds = array<i64: 1>, scalar_prefetch = 0 : i64, scratch_operands = 0 : i64, tpu.core_type = #tpu.core_type<tc>, window_params = [{transform_indices = @transform_0, window_bounds = array<i64: 20, 300>}, {pipeline_mode = #tpu.pipeline_mode<synchronous>, transform_indices = @transform_1, window_bounds = array<i64: 32, 16>}, {pipeline_mode = #tpu.pipeline_mode<synchronous>, transform_indices = @transform_2, window_bounds = array<i64: 32, 32>}, {pipeline_mode = #tpu.pipeline_mode<synchronous>, transform_indices = @transform_3, window_bounds = array<i64: 32, 36>}, {pipeline_mode = #tpu.pipeline_mode<synchronous>, transform_indices = @transform_4, window_bounds = array<i64: 32, 32>}, {pipeline_mode = #tpu.pipeline_mode<synchronous>, transform_indices = @transform_5, window_bounds = array<i64: 32, 32>}, {pipeline_mode = #tpu.pipeline_mode<synchronous>, transform_indices = @transform_6, window_bounds = array<i64: 1, 32>}, {pipeline_mode = #tpu.pipeline_mode<synchronous>, transform_indices = @transform_7, window_bounds = array<i64: 32, 6>}, {transform_indices = @transform_8, window_bounds = array<i64: 1, 300>}]} {
    %c0 = arith.constant 0 : index
    %c0_0 = arith.constant 0 : index
    %0 = vector.load %arg1[%c0, %c0_0] : memref<20x300xf32, #tpu.memory_space<vmem>>, vector<16x300xf32>
    %c16 = arith.constant 16 : index
    %c0_1 = arith.constant 0 : index
    %1 = vector.load %arg1[%c16, %c0_1] : memref<20x300xf32, #tpu.memory_space<vmem>>, vector<4x300xf32>
    %c0_2 = arith.constant 0 : index
    %c0_3 = arith.constant 0 : index
    %2 = vector.load %arg8[%c0_2, %c0_3] : memref<32x6xf32, #tpu.memory_space<vmem>>, vector<32x1xf32>
    %c0_4 = arith.constant 0 : index
    %c1 = arith.constant 1 : index
    %3 = vector.load %arg8[%c0_4, %c1] : memref<32x6xf32, #tpu.memory_space<vmem>>, vector<32x1xf32>
    %c0_5 = arith.constant 0 : index
    %c2 = arith.constant 2 : index
    %4 = vector.load %arg8[%c0_5, %c2] : memref<32x6xf32, #tpu.memory_space<vmem>>, vector<32x1xf32>
    %c0_6 = arith.constant 0 : index
    %c3 = arith.constant 3 : index
    %5 = vector.load %arg8[%c0_6, %c3] : memref<32x6xf32, #tpu.memory_space<vmem>>, vector<32x1xf32>
    %c0_7 = arith.constant 0 : index
    %c4 = arith.constant 4 : index
    %6 = vector.load %arg8[%c0_7, %c4] : memref<32x6xf32, #tpu.memory_space<vmem>>, vector<32x1xf32>
    %c0_8 = arith.constant 0 : index
    %c5 = arith.constant 5 : index
    %7 = vector.load %arg8[%c0_8, %c5] : memref<32x6xf32, #tpu.memory_space<vmem>>, vector<1x1xf32>
    %c0_9 = arith.constant 0 : index
    %c0_10 = arith.constant 0 : index
    %8 = vector.load %arg2[%c0_9, %c0_10] : memref<32x16xf32, #tpu.memory_space<vmem>>, vector<32x16xf32>
    %cst = arith.constant dense<0.000000e+00> : vector<32x300xf32>
    %9 = tpu.matmul %8, %0, %cst {dimension_numbers = #tpu.dot_dimension_numbers<[1], [0], [0], [1], [0, 0, 1, 1], [], []>} : vector<32x16xf32>, vector<16x300xf32>, vector<32x300xf32> -> vector<32x300xf32>
    %10 = vector.broadcast %2 : vector<32x1xf32> to vector<32x300xf32>
    %11 = arith.addf %9, %10 : vector<32x300xf32>
    %12 = math.tanh %11 : vector<32x300xf32>
    %c0_11 = arith.constant 0 : index
    %c0_12 = arith.constant 0 : index
    %13 = vector.load %arg3[%c0_11, %c0_12] : memref<32x32xf32, #tpu.memory_space<vmem>>, vector<32x32xf32>
    %cst_13 = arith.constant dense<0.000000e+00> : vector<32x300xf32>
    %14 = tpu.matmul %13, %12, %cst_13 {dimension_numbers = #tpu.dot_dimension_numbers<[1], [0], [0], [1], [0, 0, 1, 1], [], []>} : vector<32x32xf32>, vector<32x300xf32>, vector<32x300xf32> -> vector<32x300xf32>
    %15 = vector.broadcast %3 : vector<32x1xf32> to vector<32x300xf32>
    %16 = arith.addf %14, %15 : vector<32x300xf32>
    %c0_14 = arith.constant 0 : index
    %c0_15 = arith.constant 0 : index
    %17 = vector.load %arg4[%c0_14, %c0_15] : memref<32x36xf32, #tpu.memory_space<vmem>>, vector<32x32xf32>
    %c0_16 = arith.constant 0 : index
    %c32 = arith.constant 32 : index
    %18 = vector.load %arg4[%c0_16, %c32] : memref<32x36xf32, #tpu.memory_space<vmem>>, vector<32x4xf32>
    %cst_17 = arith.constant dense<0.000000e+00> : vector<32x300xf32>
    %19 = tpu.matmul %17, %16, %cst_17 {dimension_numbers = #tpu.dot_dimension_numbers<[1], [0], [0], [1], [0, 0, 1, 1], [], []>} : vector<32x32xf32>, vector<32x300xf32>, vector<32x300xf32> -> vector<32x300xf32>
    %cst_18 = arith.constant dense<0.000000e+00> : vector<32x300xf32>
    %20 = tpu.matmul %18, %1, %cst_18 {dimension_numbers = #tpu.dot_dimension_numbers<[1], [0], [0], [1], [0, 0, 1, 1], [], []>} : vector<32x4xf32>, vector<4x300xf32>, vector<32x300xf32> -> vector<32x300xf32>
    %21 = arith.addf %19, %20 : vector<32x300xf32>
    %22 = vector.broadcast %4 : vector<32x1xf32> to vector<32x300xf32>
    %23 = arith.addf %21, %22 : vector<32x300xf32>
    %24 = math.tanh %23 : vector<32x300xf32>
    %c0_19 = arith.constant 0 : index
    %c0_20 = arith.constant 0 : index
    %25 = vector.load %arg5[%c0_19, %c0_20] : memref<32x32xf32, #tpu.memory_space<vmem>>, vector<32x32xf32>
    %cst_21 = arith.constant dense<0.000000e+00> : vector<32x300xf32>
    %26 = tpu.matmul %25, %24, %cst_21 {dimension_numbers = #tpu.dot_dimension_numbers<[1], [0], [0], [1], [0, 0, 1, 1], [], []>} : vector<32x32xf32>, vector<32x300xf32>, vector<32x300xf32> -> vector<32x300xf32>
    %27 = vector.broadcast %5 : vector<32x1xf32> to vector<32x300xf32>
    %28 = arith.addf %26, %27 : vector<32x300xf32>
    %29 = math.tanh %28 : vector<32x300xf32>
    %c0_22 = arith.constant 0 : index
    %c0_23 = arith.constant 0 : index
    %30 = vector.load %arg6[%c0_22, %c0_23] : memref<32x32xf32, #tpu.memory_space<vmem>>, vector<32x32xf32>
    %cst_24 = arith.constant dense<0.000000e+00> : vector<32x300xf32>
    %31 = tpu.matmul %30, %29, %cst_24 {dimension_numbers = #tpu.dot_dimension_numbers<[1], [0], [0], [1], [0, 0, 1, 1], [], []>} : vector<32x32xf32>, vector<32x300xf32>, vector<32x300xf32> -> vector<32x300xf32>
    %32 = vector.broadcast %6 : vector<32x1xf32> to vector<32x300xf32>
    %33 = arith.addf %31, %32 : vector<32x300xf32>
    %34 = math.tanh %33 : vector<32x300xf32>
    %c0_25 = arith.constant 0 : index
    %c0_26 = arith.constant 0 : index
    %35 = vector.load %arg7[%c0_25, %c0_26] : memref<1x32xf32, #tpu.memory_space<vmem>>, vector<1x32xf32>
    %cst_27 = arith.constant dense<0.000000e+00> : vector<1x300xf32>
    %36 = tpu.matmul %35, %34, %cst_27 {dimension_numbers = #tpu.dot_dimension_numbers<[1], [0], [0], [1], [0, 0, 1, 1], [], []>} : vector<1x32xf32>, vector<32x300xf32>, vector<1x300xf32> -> vector<1x300xf32>
    %37 = vector.broadcast %7 : vector<1x1xf32> to vector<1x300xf32>
    %38 = arith.addf %36, %37 : vector<1x300xf32>
    %c0_28 = arith.constant 0 : index
    %c0_29 = arith.constant 0 : index
    %39 = vector.load %arg9[%c0_28, %c0_29] : memref<1x300xf32, #tpu.memory_space<vmem>>, vector<1x300xf32>
    tpu.vector_store %arg9[%c0_28, %c0_29], %38 {strides = array<i32>} : memref<1x300xf32, #tpu.memory_space<vmem>>, vector<1x300xf32>,
    return
  }
  func.func @transform_0(%arg0: i32) -> (i32, i32) {
    %c0_i32 = arith.constant 0 : i32
    %c0_i32_0 = arith.constant 0 : i32
    return %c0_i32, %arg0 : i32, i32
  }
  func.func @transform_1(%arg0: i32) -> (i32, i32) {
    %c0_i32 = arith.constant 0 : i32
    %c0_i32_0 = arith.constant 0 : i32
    %c0_i32_1 = arith.constant 0 : i32
    return %c0_i32, %c0_i32_0 : i32, i32
  }
  func.func @transform_2(%arg0: i32) -> (i32, i32) {
    %c0_i32 = arith.constant 0 : i32
    %c0_i32_0 = arith.constant 0 : i32
    %c0_i32_1 = arith.constant 0 : i32
    return %c0_i32, %c0_i32_0 : i32, i32
  }
  func.func @transform_3(%arg0: i32) -> (i32, i32) {
    %c0_i32 = arith.constant 0 : i32
    %c0_i32_0 = arith.constant 0 : i32
    %c0_i32_1 = arith.constant 0 : i32
    return %c0_i32, %c0_i32_0 : i32, i32
  }
  func.func @transform_4(%arg0: i32) -> (i32, i32) {
    %c0_i32 = arith.constant 0 : i32
    %c0_i32_0 = arith.constant 0 : i32
    %c0_i32_1 = arith.constant 0 : i32
    return %c0_i32, %c0_i32_0 : i32, i32
  }
  func.func @transform_5(%arg0: i32) -> (i32, i32) {
    %c0_i32 = arith.constant 0 : i32
    %c0_i32_0 = arith.constant 0 : i32
    %c0_i32_1 = arith.constant 0 : i32
    return %c0_i32, %c0_i32_0 : i32, i32
  }
  func.func @transform_6(%arg0: i32) -> (i32, i32) {
    %c0_i32 = arith.constant 0 : i32
    %c0_i32_0 = arith.constant 0 : i32
    %c0_i32_1 = arith.constant 0 : i32
    return %c0_i32, %c0_i32_0 : i32, i32
  }
  func.func @transform_7(%arg0: i32) -> (i32, i32) {
    %c0_i32 = arith.constant 0 : i32
    %c0_i32_0 = arith.constant 0 : i32
    %c0_i32_1 = arith.constant 0 : i32
    return %c0_i32, %c0_i32_0 : i32, i32
  }
  func.func @transform_8(%arg0: i32) -> (i32, i32) {
    %c0_i32 = arith.constant 0 : i32
    %c0_i32_0 = arith.constant 0 : i32
    return %c0_i32, %arg0 : i32, i32
  }
}

</mosaic_0001>

<llo_original>
// kernel: tpu_custom_call.1
$region0: #{tpu_custom_call.1}
  #allocation0 [shape = 'u32[]', space=smem, size = 0x4, offset = 0x4, fixed_abs, tag = 'smem constant byte address 0x4 - core index']
  #allocation1 [shape = 'u32[144,128]{1,0:T(1,128)}', space=vmem, size = 0x12000, scoped, tag = 'internal scratch']
  %s0 = inlined_call_operand.vmem [shape: f32[20,300], index: 0, kind: input, shape index: {}]
  %s1 = inlined_call_operand.vmem [shape: f32[32,16], index: 1, kind: input, shape index: {}]
  %s2 = inlined_call_operand.hbm [shape: f32[32,32], index: 2, kind: input, shape index: {}]
  %s3 = inlined_call_operand.hbm [shape: f32[32,36], index: 3, kind: input, shape index: {}]
  %s4 = inlined_call_operand.hbm [shape: f32[32,32], index: 4, kind: input, shape index: {}]
  %s5 = inlined_call_operand.vmem [shape: f32[32,32], index: 5, kind: input, shape index: {}]
  %s6 = inlined_call_operand.vmem [shape: f32[1,32], index: 6, kind: input, shape index: {}]
  %s7 = inlined_call_operand.vmem [shape: f32[32,6], index: 7, kind: input, shape index: {}]
  %s8 = inlined_call_operand.hbm [shape: f32[1,300], index: 8, kind: output, shape index: {}]
  %s9 = sld [smem:[#allocation0]]
  $region54: #{tpu_custom_call.1} parent=0
    _
  %s11 = ssub.s32 1, %s9
  %s12 = scalar_select 0, %s11, %s9
  $region1: #{tpu_custom_call.1} parent=0
    #allocation2 [shape = 'u8[16384]{0}', space=vmem, size = 0x4000, scoped, tag = 'input window, operand 2, single buffered']
    #allocation3 [shape = 's32[1]{0}', space=sflag, size = 0x4, scoped, tag = 'scoped memory for tpu_custom_call.1']
    #allocation4 [shape = 's32[1]{0}', space=sflag, size = 0x4, scoped, tag = 'scoped memory for tpu_custom_call.1']
    #allocation5 [shape = 'u8[16384]{0}', space=vmem, size = 0x4000, scoped, tag = 'input window, operand 3, single buffered']
    #allocation6 [shape = 's32[1]{0}', space=sflag, size = 0x4, scoped, tag = 'scoped memory for tpu_custom_call.1']
    #allocation7 [shape = 'u8[16384]{0}', space=vmem, size = 0x4000, scoped, tag = 'input window, operand 4, single buffered']
    #allocation8 [shape = 'u8[1536]{0}', space=vmem, size = 0x800, scoped, tag = 'output window, operand 0, single buffered']
    %13 = vsyncpa [#allocation3], 0
    %14 = vsyncpa [#allocation6], 0
    %15 = vsyncpa [#allocation4], 0
    // Predicated region
    $region2: #{tpu_custom_call.1} parent=1 // pred_check
      _
    $region3: #{tpu_custom_call.1} parent=1 // pred_check_branch
      %17 = sbr.rel (0) target = $region5
    $region4: #{tpu_custom_call.1} parent=1 // pred_region
      _
    $region5: #{tpu_custom_call.1} parent=1 // pred_fallthru
      _
    // Predicated region
    $region6: #{tpu_custom_call.1} parent=1 // pred_check
      _
    $region7: #{tpu_custom_call.1} parent=1 // pred_check_branch
      %19 = sbr.rel (0) target = $region9
    $region8: #{tpu_custom_call.1} parent=1 // pred_region
      _
    $region9: #{tpu_custom_call.1} parent=1 // pred_fallthru
      _
    // Predicated region
    $region10: #{tpu_custom_call.1} parent=1 // pred_check
      _
    $region11: #{tpu_custom_call.1} parent=1 // pred_check_branch
      %21 = sbr.rel (0) target = $region13
    $region12: #{tpu_custom_call.1} parent=1 // pred_region
      %s23 = ssub.s32 512, 512
      %24 = vsyncadd [#allocation3], %s23
      %s25 = sshll.u32 [#allocation2], 4
      %s26 = int_to_ptr.vmem [resolvable:$true] %s25
      %31 = dma.hbm_to_vmem [thread:$0]  %s2, 512, %s26, [#allocation3], 128, 128, 8
    $region13: #{tpu_custom_call.1} parent=1 // pred_fallthru
      _
    // Predicated region
    $region14: #{tpu_custom_call.1} parent=1 // pred_check
      _
    $region15: #{tpu_custom_call.1} parent=1 // pred_check_branch
      %33 = sbr.rel (0) target = $region17
    $region16: #{tpu_custom_call.1} parent=1 // pred_region
      %s35 = ssub.s32 512, 512
      %36 = vsyncadd [#allocation6], %s35
      %s37 = sshll.u32 [#allocation5], 4
      %s38 = int_to_ptr.vmem [resolvable:$true] %s37
      %43 = dma.hbm_to_vmem [thread:$0]  %s3, 512, %s38, [#allocation6], 128, 128, 8
    $region17: #{tpu_custom_call.1} parent=1 // pred_fallthru
      _
    // Predicated region
    $region18: #{tpu_custom_call.1} parent=1 // pred_check
      _
    $region19: #{tpu_custom_call.1} parent=1 // pred_check_branch
      %45 = sbr.rel (0) target = $region21
    $region20: #{tpu_custom_call.1} parent=1 // pred_region
      %s47 = ssub.s32 512, 512
      %48 = vsyncadd [#allocation6], %s47
      %s49 = sshll.u32 [#allocation7], 4
      %s50 = int_to_ptr.vmem [resolvable:$true] %s49
      %55 = dma.hbm_to_vmem [thread:$0]  %s4, 512, %s50, [#allocation6], 128, 128, 8
    $region21: #{tpu_custom_call.1} parent=1 // pred_fallthru
      _
    // Predicated region
    $region22: #{tpu_custom_call.1} parent=1 // pred_check
      _
    $region23: #{tpu_custom_call.1} parent=1 // pred_check_branch
      %57 = sbr.rel (0) target = $region25
    $region24: #{tpu_custom_call.1} parent=1 // pred_region
      _
    $region25: #{tpu_custom_call.1} parent=1 // pred_fallthru
      _
    // Predicated region
    $region26: #{tpu_custom_call.1} parent=1 // pred_check
      _
    $region27: #{tpu_custom_call.1} parent=1 // pred_check_branch
      %59 = sbr.rel (0) target = $region29
    $region28: #{tpu_custom_call.1} parent=1 // pred_region
      _
    $region29: #{tpu_custom_call.1} parent=1 // pred_fallthru
      _
    // Predicated region
    $region30: #{tpu_custom_call.1} parent=1 // pred_check
      _
    $region31: #{tpu_custom_call.1} parent=1 // pred_check_branch
      %61 = sbr.rel (0) target = $region33
    $region32: #{tpu_custom_call.1} parent=1 // pred_region
      _
    $region33: #{tpu_custom_call.1} parent=1 // pred_fallthru
      _
    // Predicated region
    $region34: #{tpu_custom_call.1} parent=1 // pred_check
      _
    $region35: #{tpu_custom_call.1} parent=1 // pred_check_branch
      %63 = sbr.rel (0) target = $region37
    $region36: #{tpu_custom_call.1} parent=1 // pred_region
      %64 = dma.done [#allocation3], 512
    $region37: #{tpu_custom_call.1} parent=1 // pred_fallthru
      _
    // Predicated region
    $region38: #{tpu_custom_call.1} parent=1 // pred_check
      _
    $region39: #{tpu_custom_call.1} parent=1 // pred_check_branch
      %66 = sbr.rel (0) target = $region41
    $region40: #{tpu_custom_call.1} parent=1 // pred_region
      %67 = dma.done [#allocation6], 512
    $region41: #{tpu_custom_call.1} parent=1 // pred_fallthru
      _
    // Predicated region
    $region42: #{tpu_custom_call.1} parent=1 // pred_check
      _
    $region43: #{tpu_custom_call.1} parent=1 // pred_check_branch
      %69 = sbr.rel (0) target = $region45
    $region44: #{tpu_custom_call.1} parent=1 // pred_region
      %70 = dma.done [#allocation6], 512
    $region45: #{tpu_custom_call.1} parent=1 // pred_fallthru
      _
    %v71 = vld [vmem:[%s0] sm:$0xff]
    %v72 = vld [vmem:[%s0 + $0x8] sm:$0xff]
    %v73 = vld [vmem:[%s0 + $0x10] sm:$0xff]
    %v74 = vld [vmem:[%s0 + $0x18] sm:$0xff]
    %v75 = vld [vmem:[%s0 + $0x20] sm:$0xff]
    %v76 = vld [vmem:[%s0 + $0x28] sm:$0xff]
    %v77 = vld [vmem:[%s0 + $0x30] sm:$0xf]
    %v78 = vld [vmem:[%s0 + $0x38] sm:$0xf]
    %v79 = vld [vmem:[%s0 + $0x40] sm:$0xf]
    %v80 = vld [vmem:[%s7] sm:$0xff]
    %v81 = vld [vmem:[%s7 + $0x8] sm:$0xff]
    %v82 = vld [vmem:[%s7 + $0x10] sm:$0xff]
    %v83 = vld [vmem:[%s7 + $0x18] sm:$0xff]
    %v84 = vld [vmem:[%s7] sm:$0x1]
    %v85 = vld [vmem:[%s1] sm:$0xff]
    %v86 = vld [vmem:[%s1 + $0x8] sm:$0xff]
    %v87 = vld [vmem:[%s1 + $0x10] sm:$0xff]
    %v88 = vld [vmem:[%s1 + $0x18] sm:$0xff]
    %90 = vset.pattern.permute.xlu0 0
    %91 = vperm.xlu0 %90, %v80
    %v92 = vpop.permute.xlu0 %91
    %95 = vset.pattern.permute.xlu0 0
    %96 = vperm.xlu0 %95, %v81
    %v97 = vpop.permute.xlu0 %96
    %100 = vset.pattern.permute.xlu0 0
    %101 = vperm.xlu0 %100, %v82
    %v102 = vpop.permute.xlu0 %101
    %105 = vset.pattern.permute.xlu0 0
    %106 = vperm.xlu0 %105, %v83
    %v107 = vpop.permute.xlu0 %106
    %vm109 = vcmask 130048
    %v111 = vsel %vm109, %v85, 0
    %v114 = vsel %vm109, %v86, 0
    %v117 = vsel %vm109, %v87, 0
    %v120 = vsel %vm109, %v88, 0
    %122 = vmatprep.subr.mxu0 %v72
    %123 = vmatpush1.msra.mxu0 %v71
    %124 = vmatprep.subr.mxu0 %v75
    %125 = vmatpush1.msra.mxu0 %v74
    %126 = vmatprep.subr.mxu0 0.0
    %127 = vmatpush1.msra.mxu0 0.0
    %128 = vmatprep.subr.mxu0 0.0
    %129 = vmatpush1.msra.mxu0 0.0
    %130 = vmatprep.subr.mxu0 0.0
    %131 = vmatpush1.msra.mxu0 0.0
    %132 = vmatprep.subr.mxu0 0.0
    %133 = vmatpush1.msra.mxu0 0.0
    %134 = vmatprep.subr.mxu0 0.0
    %135 = vmatpush1.msra.mxu0 0.0
    %136 = vmatprep.subr.mxu0 0.0
    %137 = vmatpush1.msra.mxu0 0.0
    %138 = vmatprep.subr.mxu0 0.0
    %139 = vmatpush1.msra.mxu0 0.0
    %140 = vmatprep.subr.mxu0 0.0
    %141 = vmatpush1.msra.mxu0 0.0
    %142 = vmatprep.subr.mxu0 0.0
    %143 = vmatpush1.msra.mxu0 0.0
    %144 = vmatprep.subr.mxu0 0.0
    %145 = vmatpush1.msra.mxu0 0.0
    %146 = vmatprep.subr.mxu0 0.0
    %147 = vmatpush1.msra.mxu0 0.0
    %148 = vmatprep.subr.mxu0 0.0
    %149 = vmatpush1.msra.mxu0 0.0
    %150 = vmatprep.subr.mxu0 0.0
    %151 = vmatpush1.msra.mxu0 0.0
    %152 = vmatprep.subr.mxu0 0.0
    %153 = vmatpush1.msra.mxu0 0.0
    %154 = vmatprep.subr.mxu0 0.0
    %155 = vmatpush1.msra.mxu0 0.0
    %156 = vmatprep.subr.mxu0 0.0
    %157 = vmatpush1.msra.mxu0 0.0
    %158 = vmatprep.subr.mxu0 0.0
    %159 = vmatpush1.msra.mxu0 0.0
    %160 = vmatprep.subr.mxu0 0.0
    %161 = vmatpush1.msra.mxu0 0.0
    %162 = vmatprep.subr.mxu0 0.0
    %163 = vmatpush1.msra.mxu0 0.0
    %164 = vmatprep.subr.mxu0 0.0
    %165 = vmatpush1.msra.mxu0 0.0
    %166 = vmatprep.subr.mxu0 0.0
    %167 = vmatpush1.msra.mxu0 0.0
    %168 = vmatprep.subr.mxu0 0.0
    %169 = vmatpush1.msra.mxu0 0.0
    %170 = vmatprep.subr.mxu0 0.0
    %171 = vmatpush1.msra.mxu0 0.0
    %172 = vmatprep.subr.mxu0 0.0
    %173 = vmatpush1.msra.mxu0 0.0
    %174 = vmatprep.subr.mxu0 0.0
    %175 = vmatpush1.msra.mxu0 0.0
    %176 = vmatprep.subr.mxu0 0.0
    %177 = vmatpush1.msra.mxu0 0.0
    %178 = vmatprep.subr.mxu0 0.0
    %179 = vmatpush1.msra.mxu0 0.0
    %180 = vmatprep.subr.mxu0 0.0
    %181 = vmatpush1.msra.mxu0 0.0
    %182 = vmatprep.subr.mxu0 0.0
    %183 = vmatpush1.msra.mxu0 0.0
    %184 = vmatprep.subr.mxu0 0.0
    %185 = vmatpush1.msra.mxu0 0.0
    %186 = vmatprep.mubr.f32.mxu0 0.0
    %187 = vmatmul.mubr.f32.gmra.mrb[0].mxu0 %v111
    %v188 = vpop.f32.mrb[0].mxu0
    %v189 = vadd.f32 %v92, %v188
    %v190 = vpop.f32.mrb[0].mxu0
    %v191 = vadd.f32 %v92, %v190
    %192 = vmatprep.mubr.f32.mxu0 0.0
    %193 = vmatmul.mubr.f32.gmra.mrb[0].mxu0 %v114
    %v194 = vpop.f32.mrb[0].mxu0
    %v195 = vadd.f32 %v97, %v194
    %v196 = vpop.f32.mrb[0].mxu0
    %v197 = vadd.f32 %v97, %v196
    %198 = vmatprep.mubr.f32.mxu0 0.0
    %199 = vmatmul.mubr.f32.gmra.mrb[0].mxu0 %v117
    %v200 = vpop.f32.mrb[0].mxu0
    %v201 = vadd.f32 %v102, %v200
    %v202 = vpop.f32.mrb[0].mxu0
    %v203 = vadd.f32 %v102, %v202
    %204 = vmatprep.mubr.f32.mxu0 0.0
    %205 = vmatmul.mubr.f32.gmra.mrb[0].mxu0 %v120
    %v206 = vpop.f32.mrb[0].mxu0
    %v207 = vadd.f32 %v107, %v206
    %v208 = vpop.f32.mrb[0].mxu0
    %v209 = vadd.f32 %v107, %v208
    %210 = vdwg.mxu0
    %211 = vmatprep.subr.mxu0 0.0
    %212 = vmatpush1.msra.mxu0 %v73
    %213 = vmatprep.subr.mxu0 0.0
    %214 = vmatpush1.msra.mxu0 %v76
    %215 = vmatprep.subr.mxu0 0.0
    %216 = vmatpush1.msra.mxu0 0.0
    %217 = vmatprep.subr.mxu0 0.0
    %218 = vmatpush1.msra.mxu0 0.0
    %219 = vmatprep.subr.mxu0 0.0
    %220 = vmatpush1.msra.mxu0 0.0
    %221 = vmatprep.subr.mxu0 0.0
    %222 = vmatpush1.msra.mxu0 0.0
    %223 = vmatprep.subr.mxu0 0.0
    %224 = vmatpush1.msra.mxu0 0.0
    %225 = vmatprep.subr.mxu0 0.0
    %226 = vmatpush1.msra.mxu0 0.0
    %227 = vmatprep.subr.mxu0 0.0
    %228 = vmatpush1.msra.mxu0 0.0
    %229 = vmatprep.subr.mxu0 0.0
    %230 = vmatpush1.msra.mxu0 0.0
    %231 = vmatprep.subr.mxu0 0.0
    %232 = vmatpush1.msra.mxu0 0.0
    %233 = vmatprep.subr.mxu0 0.0
    %234 = vmatpush1.msra.mxu0 0.0
    %235 = vmatprep.subr.mxu0 0.0
    %236 = vmatpush1.msra.mxu0 0.0
    %237 = vmatprep.subr.mxu0 0.0
    %238 = vmatpush1.msra.mxu0 0.0
    %239 = vmatprep.subr.mxu0 0.0
    %240 = vmatpush1.msra.mxu0 0.0
    %241 = vmatprep.subr.mxu0 0.0
    %242 = vmatpush1.msra.mxu0 0.0
    %243 = vmatprep.subr.mxu0 0.0
    %244 = vmatpush1.msra.mxu0 0.0
    %245 = vmatprep.subr.mxu0 0.0
    %246 = vmatpush1.msra.mxu0 0.0
    %247 = vmatprep.subr.mxu0 0.0
    %248 = vmatpush1.msra.mxu0 0.0
    %249 = vmatprep.subr.mxu0 0.0
    %250 = vmatpush1.msra.mxu0 0.0
    %251 = vmatprep.subr.mxu0 0.0
    %252 = vmatpush1.msra.mxu0 0.0
    %253 = vmatprep.subr.mxu0 0.0
    %254 = vmatpush1.msra.mxu0 0.0
    %255 = vmatprep.subr.mxu0 0.0
    %256 = vmatpush1.msra.mxu0 0.0
    %257 = vmatprep.subr.mxu0 0.0
    %258 = vmatpush1.msra.mxu0 0.0
    %259 = vmatprep.subr.mxu0 0.0
    %260 = vmatpush1.msra.mxu0 0.0
    %261 = vmatprep.subr.mxu0 0.0
    %262 = vmatpush1.msra.mxu0 0.0
    %263 = vmatprep.subr.mxu0 0.0
    %264 = vmatpush1.msra.mxu0 0.0
    %265 = vmatprep.subr.mxu0 0.0
    %266 = vmatpush1.msra.mxu0 0.0
    %267 = vmatprep.subr.mxu0 0.0
    %268 = vmatpush1.msra.mxu0 0.0
    %269 = vmatprep.subr.mxu0 0.0
    %270 = vmatpush1.msra.mxu0 0.0
    %271 = vmatprep.subr.mxu0 0.0
    %272 = vmatpush1.msra.mxu0 0.0
    %273 = vmatprep.subr.mxu0 0.0
    %274 = vmatpush1.msra.mxu0 0.0
    %275 = vmatprep.mubr.f32.mxu0 0.0
    %276 = vmatmul.mubr.f32.gmra.mrb[0].mxu0 %v111
    %v277 = vpop.f32.mrb[0].mxu0
    %v278 = vadd.f32 %v92, %v277
    %v279 = vpop.f32.mrb[0].mxu0
    %280 = vmatprep.mubr.f32.mxu0 0.0
    %281 = vmatmul.mubr.f32.gmra.mrb[0].mxu0 %v114
    %v282 = vpop.f32.mrb[0].mxu0
    %v283 = vadd.f32 %v97, %v282
    %v284 = vpop.f32.mrb[0].mxu0
    %285 = vmatprep.mubr.f32.mxu0 0.0
    %286 = vmatmul.mubr.f32.gmra.mrb[0].mxu0 %v117
    %v287 = vpop.f32.mrb[0].mxu0
    %v288 = vadd.f32 %v102, %v287
    %v289 = vpop.f32.mrb[0].mxu0
    %290 = vmatprep.mubr.f32.mxu0 0.0
    %291 = vmatmul.mubr.f32.gmra.mrb[0].mxu0 %v120
    %v292 = vpop.f32.mrb[0].mxu0
    %v293 = vadd.f32 %v107, %v292
    %v294 = vpop.f32.mrb[0].mxu0
    %295 = vdwg.mxu0
    %v296 = vtanh.pop %v189
    %v297 = vtanh.pop %v191
    %v298 = vtanh.pop %v278
    %v299 = vtanh.pop %v195
    %v300 = vtanh.pop %v197
    %v301 = vtanh.pop %v283
    %v302 = vtanh.pop %v201
    %v303 = vtanh.pop %v203
    %v304 = vtanh.pop %v288
    %v305 = vtanh.pop %v207
    %v306 = vtanh.pop %v209
    %v307 = vtanh.pop %v293
    %v308 = vld [vmem:[#allocation2] sm:$0xff]
    %v309 = vld [vmem:[#allocation2 + $0x8] sm:$0xff]
    %v310 = vld [vmem:[#allocation2 + $0x10] sm:$0xff]
    %v311 = vld [vmem:[#allocation2 + $0x18] sm:$0xff]
    %312 = vset.pattern.permute.xlu0 1
    %313 = vperm.xlu0 %312, %v80
    %v314 = vpop.permute.xlu0 %313
    %316 = vset.pattern.permute.xlu0 1
    %317 = vperm.xlu0 %316, %v81
    %v318 = vpop.permute.xlu0 %317
    %320 = vset.pattern.permute.xlu0 1
    %321 = vperm.xlu0 %320, %v82
    %v322 = vpop.permute.xlu0 %321
    %324 = vset.pattern.permute.xlu0 1
    %325 = vperm.xlu0 %324, %v83
    %v326 = vpop.permute.xlu0 %325
    %vm328 = vcmask 261120
    %v330 = vsel %vm328, %v308, 0
    %v333 = vsel %vm328, %v309, 0
    %v336 = vsel %vm328, %v310, 0
    %v339 = vsel %vm328, %v311, 0
    %341 = vmatprep.subr.mxu0 %v297
    %342 = vmatpush1.msra.mxu0 %v296
    %343 = vmatprep.subr.mxu0 %v300
    %344 = vmatpush1.msra.mxu0 %v299
    %345 = vmatprep.subr.mxu0 %v303
    %346 = vmatpush1.msra.mxu0 %v302
    %347 = vmatprep.subr.mxu0 %v306
    %348 = vmatpush1.msra.mxu0 %v305
    %349 = vmatprep.subr.mxu0 0.0
    %350 = vmatpush1.msra.mxu0 0.0
    %351 = vmatprep.subr.mxu0 0.0
    %352 = vmatpush1.msra.mxu0 0.0
    %353 = vmatprep.subr.mxu0 0.0
    %354 = vmatpush1.msra.mxu0 0.0
    %355 = vmatprep.subr.mxu0 0.0
    %356 = vmatpush1.msra.mxu0 0.0
    %357 = vmatprep.subr.mxu0 0.0
    %358 = vmatpush1.msra.mxu0 0.0
    %359 = vmatprep.subr.mxu0 0.0
    %360 = vmatpush1.msra.mxu0 0.0
    %361 = vmatprep.subr.mxu0 0.0
    %362 = vmatpush1.msra.mxu0 0.0
    %363 = vmatprep.subr.mxu0 0.0
    %364 = vmatpush1.msra.mxu0 0.0
    %365 = vmatprep.subr.mxu0 0.0
    %366 = vmatpush1.msra.mxu0 0.0
    %367 = vmatprep.subr.mxu0 0.0
    %368 = vmatpush1.msra.mxu0 0.0
    %369 = vmatprep.subr.mxu0 0.0
    %370 = vmatpush1.msra.mxu0 0.0
    %371 = vmatprep.subr.mxu0 0.0
    %372 = vmatpush1.msra.mxu0 0.0
    %373 = vmatprep.subr.mxu0 0.0
    %374 = vmatpush1.msra.mxu0 0.0
    %375 = vmatprep.subr.mxu0 0.0
    %376 = vmatpush1.msra.mxu0 0.0
    %377 = vmatprep.subr.mxu0 0.0
    %378 = vmatpush1.msra.mxu0 0.0
    %379 = vmatprep.subr.mxu0 0.0
    %380 = vmatpush1.msra.mxu0 0.0
    %381 = vmatprep.subr.mxu0 0.0
    %382 = vmatpush1.msra.mxu0 0.0
    %383 = vmatprep.subr.mxu0 0.0
    %384 = vmatpush1.msra.mxu0 0.0
    %385 = vmatprep.subr.mxu0 0.0
    %386 = vmatpush1.msra.mxu0 0.0
    %387 = vmatprep.subr.mxu0 0.0
    %388 = vmatpush1.msra.mxu0 0.0
    %389 = vmatprep.subr.mxu0 0.0
    %390 = vmatpush1.msra.mxu0 0.0
    %391 = vmatprep.subr.mxu0 0.0
    %392 = vmatpush1.msra.mxu0 0.0
    %393 = vmatprep.subr.mxu0 0.0
    %394 = vmatpush1.msra.mxu0 0.0
    %395 = vmatprep.subr.mxu0 0.0
    %396 = vmatpush1.msra.mxu0 0.0
    %397 = vmatprep.subr.mxu0 0.0
    %398 = vmatpush1.msra.mxu0 0.0
    %399 = vmatprep.subr.mxu0 0.0
    %400 = vmatpush1.msra.mxu0 0.0
    %401 = vmatprep.subr.mxu0 0.0
    %402 = vmatpush1.msra.mxu0 0.0
    %403 = vmatprep.subr.mxu0 0.0
    %404 = vmatpush1.msra.mxu0 0.0
    %405 = vmatprep.mubr.f32.mxu0 0.0
    %406 = vmatmul.mubr.f32.gmra.mrb[0].mxu0 %v330
    %v407 = vpop.f32.mrb[0].mxu0
    %v408 = vadd.f32 %v314, %v407
    %v409 = vpop.f32.mrb[0].mxu0
    %v410 = vadd.f32 %v314, %v409
    %411 = vmatprep.mubr.f32.mxu0 0.0
    %412 = vmatmul.mubr.f32.gmra.mrb[0].mxu0 %v333
    %v413 = vpop.f32.mrb[0].mxu0
    %v414 = vadd.f32 %v318, %v413
    %v415 = vpop.f32.mrb[0].mxu0
    %v416 = vadd.f32 %v318, %v415
    %417 = vmatprep.mubr.f32.mxu0 0.0
    %418 = vmatmul.mubr.f32.gmra.mrb[0].mxu0 %v336
    %v419 = vpop.f32.mrb[0].mxu0
    %v420 = vadd.f32 %v322, %v419
    %v421 = vpop.f32.mrb[0].mxu0
    %v422 = vadd.f32 %v322, %v421
    %423 = vmatprep.mubr.f32.mxu0 0.0
    %424 = vmatmul.mubr.f32.gmra.mrb[0].mxu0 %v339
    %v425 = vpop.f32.mrb[0].mxu0
    %v426 = vadd.f32 %v326, %v425
    %v427 = vpop.f32.mrb[0].mxu0
    %v428 = vadd.f32 %v326, %v427
    %429 = vdwg.mxu0
    %430 = vmatprep.subr.mxu0 0.0
    %431 = vmatpush1.msra.mxu0 %v298
    %432 = vmatprep.subr.mxu0 0.0
    %433 = vmatpush1.msra.mxu0 %v301
    %434 = vmatprep.subr.mxu0 0.0
    %435 = vmatpush1.msra.mxu0 %v304
    %436 = vmatprep.subr.mxu0 0.0
    %437 = vmatpush1.msra.mxu0 %v307
    %438 = vmatprep.subr.mxu0 0.0
    %439 = vmatpush1.msra.mxu0 0.0
    %440 = vmatprep.subr.mxu0 0.0
    %441 = vmatpush1.msra.mxu0 0.0
    %442 = vmatprep.subr.mxu0 0.0
    %443 = vmatpush1.msra.mxu0 0.0
    %444 = vmatprep.subr.mxu0 0.0
    %445 = vmatpush1.msra.mxu0 0.0
    %446 = vmatprep.subr.mxu0 0.0
    %447 = vmatpush1.msra.mxu0 0.0
    %448 = vmatprep.subr.mxu0 0.0
    %449 = vmatpush1.msra.mxu0 0.0
    %450 = vmatprep.subr.mxu0 0.0
    %451 = vmatpush1.msra.mxu0 0.0
    %452 = vmatprep.subr.mxu0 0.0
    %453 = vmatpush1.msra.mxu0 0.0
    %454 = vmatprep.subr.mxu0 0.0
    %455 = vmatpush1.msra.mxu0 0.0
    %456 = vmatprep.subr.mxu0 0.0
    %457 = vmatpush1.msra.mxu0 0.0
    %458 = vmatprep.subr.mxu0 0.0
    %459 = vmatpush1.msra.mxu0 0.0
    %460 = vmatprep.subr.mxu0 0.0
    %461 = vmatpush1.msra.mxu0 0.0
    %462 = vmatprep.subr.mxu0 0.0
    %463 = vmatpush1.msra.mxu0 0.0
    %464 = vmatprep.subr.mxu0 0.0
    %465 = vmatpush1.msra.mxu0 0.0
    %466 = vmatprep.subr.mxu0 0.0
    %467 = vmatpush1.msra.mxu0 0.0
    %468 = vmatprep.subr.mxu0 0.0
    %469 = vmatpush1.msra.mxu0 0.0
    %470 = vmatprep.subr.mxu0 0.0
    %471 = vmatpush1.msra.mxu0 0.0
    %472 = vmatprep.subr.mxu0 0.0
    %473 = vmatpush1.msra.mxu0 0.0
    %474 = vmatprep.subr.mxu0 0.0
    %475 = vmatpush1.msra.mxu0 0.0
    %476 = vmatprep.subr.mxu0 0.0
    %477 = vmatpush1.msra.mxu0 0.0
    %478 = vmatprep.subr.mxu0 0.0
    %479 = vmatpush1.msra.mxu0 0.0
    %480 = vmatprep.subr.mxu0 0.0
    %481 = vmatpush1.msra.mxu0 0.0
    %482 = vmatprep.subr.mxu0 0.0
    %483 = vmatpush1.msra.mxu0 0.0
    %484 = vmatprep.subr.mxu0 0.0
    %485 = vmatpush1.msra.mxu0 0.0
    %486 = vmatprep.subr.mxu0 0.0
    %487 = vmatpush1.msra.mxu0 0.0
    %488 = vmatprep.subr.mxu0 0.0
    %489 = vmatpush1.msra.mxu0 0.0
    %490 = vmatprep.subr.mxu0 0.0
    %491 = vmatpush1.msra.mxu0 0.0
    %492 = vmatprep.subr.mxu0 0.0
    %493 = vmatpush1.msra.mxu0 0.0
    %494 = vmatprep.mubr.f32.mxu0 0.0
    %495 = vmatmul.mubr.f32.gmra.mrb[0].mxu0 %v330
    %v496 = vpop.f32.mrb[0].mxu0
    %v497 = vadd.f32 %v314, %v496
    %v498 = vpop.f32.mrb[0].mxu0
    %499 = vmatprep.mubr.f32.mxu0 0.0
    %500 = vmatmul.mubr.f32.gmra.mrb[0].mxu0 %v333
    %v501 = vpop.f32.mrb[0].mxu0
    %v502 = vadd.f32 %v318, %v501
    %v503 = vpop.f32.mrb[0].mxu0
    %504 = vmatprep.mubr.f32.mxu0 0.0
    %505 = vmatmul.mubr.f32.gmra.mrb[0].mxu0 %v336
    %v506 = vpop.f32.mrb[0].mxu0
    %v507 = vadd.f32 %v322, %v506
    %v508 = vpop.f32.mrb[0].mxu0
    %509 = vmatprep.mubr.f32.mxu0 0.0
    %510 = vmatmul.mubr.f32.gmra.mrb[0].mxu0 %v339
    %v511 = vpop.f32.mrb[0].mxu0
    %v512 = vadd.f32 %v326, %v511
    %v513 = vpop.f32.mrb[0].mxu0
    %514 = vdwg.mxu0
    %v515 = vld [vmem:[#allocation5] sm:$0xff]
    %v516 = vld [vmem:[#allocation5 + $0x8] sm:$0xff]
    %v517 = vld [vmem:[#allocation5 + $0x10] sm:$0xff]
    %v518 = vld [vmem:[#allocation5 + $0x18] sm:$0xff]
    %523 = vrot.lane.b32.xlu0 %v515, 96
    %v524 = vpop.permute.xlu0 %523
    %525 = vrot.lane.b32.xlu0 %v516, 96
    %v526 = vpop.permute.xlu0 %525
    %527 = vrot.lane.b32.xlu0 %v517, 96
    %v528 = vpop.permute.xlu0 %527
    %529 = vrot.lane.b32.xlu0 %v518, 96
    %v530 = vpop.permute.xlu0 %529
    %vm531 = vcmask 31744
    %v532 = vsel %vm531, %v524, 0
    %v534 = vsel %vm531, %v526, 0
    %v536 = vsel %vm531, %v528, 0
    %v538 = vsel %vm531, %v530, 0
    %vm540 = vcmask 1043456
    %v542 = vsel %vm540, %v77, 0
    %v545 = vsel %vm540, %v78, 0
    %v548 = vsel %vm540, %v79, 0
    %550 = vmatprep.subr.mxu0 %v545
    %551 = vmatpush1.msra.mxu0 %v542
    %552 = vmatprep.subr.mxu0 0.0
    %553 = vmatpush1.msra.mxu0 0.0
    %554 = vmatprep.subr.mxu0 0.0
    %555 = vmatpush1.msra.mxu0 0.0
    %556 = vmatprep.subr.mxu0 0.0
    %557 = vmatpush1.msra.mxu0 0.0
    %558 = vmatprep.subr.mxu0 0.0
    %559 = vmatpush1.msra.mxu0 0.0
    %560 = vmatprep.subr.mxu0 0.0
    %561 = vmatpush1.msra.mxu0 0.0
    %562 = vmatprep.subr.mxu0 0.0
    %563 = vmatpush1.msra.mxu0 0.0
    %564 = vmatprep.subr.mxu0 0.0
    %565 = vmatpush1.msra.mxu0 0.0
    %566 = vmatprep.subr.mxu0 0.0
    %567 = vmatpush1.msra.mxu0 0.0
    %568 = vmatprep.subr.mxu0 0.0
    %569 = vmatpush1.msra.mxu0 0.0
    %570 = vmatprep.subr.mxu0 0.0
    %571 = vmatpush1.msra.mxu0 0.0
    %572 = vmatprep.subr.mxu0 0.0
    %573 = vmatpush1.msra.mxu0 0.0
    %574 = vmatprep.subr.mxu0 0.0
    %575 = vmatpush1.msra.mxu0 0.0
    %576 = vmatprep.subr.mxu0 0.0
    %577 = vmatpush1.msra.mxu0 0.0
    %578 = vmatprep.subr.mxu0 0.0
    %579 = vmatpush1.msra.mxu0 0.0
    %580 = vmatprep.subr.mxu0 0.0
    %581 = vmatpush1.msra.mxu0 0.0
    %582 = vmatprep.subr.mxu0 0.0
    %583 = vmatpush1.msra.mxu0 0.0
    %584 = vmatprep.subr.mxu0 0.0
    %585 = vmatpush1.msra.mxu0 0.0
    %586 = vmatprep.subr.mxu0 0.0
    %587 = vmatpush1.msra.mxu0 0.0
    %588 = vmatprep.subr.mxu0 0.0
    %589 = vmatpush1.msra.mxu0 0.0
    %590 = vmatprep.subr.mxu0 0.0
    %591 = vmatpush1.msra.mxu0 0.0
    %592 = vmatprep.subr.mxu0 0.0
    %593 = vmatpush1.msra.mxu0 0.0
    %594 = vmatprep.subr.mxu0 0.0
    %595 = vmatpush1.msra.mxu0 0.0
    %596 = vmatprep.subr.mxu0 0.0
    %597 = vmatpush1.msra.mxu0 0.0
    %598 = vmatprep.subr.mxu0 0.0
    %599 = vmatpush1.msra.mxu0 0.0
    %600 = vmatprep.subr.mxu0 0.0
    %601 = vmatpush1.msra.mxu0 0.0
    %602 = vmatprep.subr.mxu0 0.0
    %603 = vmatpush1.msra.mxu0 0.0
    %604 = vmatprep.subr.mxu0 0.0
    %605 = vmatpush1.msra.mxu0 0.0
    %606 = vmatprep.subr.mxu0 0.0
    %607 = vmatpush1.msra.mxu0 0.0
    %608 = vmatprep.subr.mxu0 0.0
    %609 = vmatpush1.msra.mxu0 0.0
    %610 = vmatprep.subr.mxu0 0.0
    %611 = vmatpush1.msra.mxu0 0.0
    %612 = vmatprep.subr.mxu0 0.0
    %613 = vmatpush1.msra.mxu0 0.0
    %614 = vmatprep.mubr.f32.mxu0 0.0
    %615 = vmatmul.mubr.f32.gmra.mrb[0].mxu0 %v532
    %v616 = vpop.f32.mrb[0].mxu0
    %v617 = vadd.f32 0.0, %v616
    %v618 = vpop.f32.mrb[0].mxu0
    %v619 = vadd.f32 0.0, %v618
    %620 = vmatprep.mubr.f32.mxu0 0.0
    %621 = vmatmul.mubr.f32.gmra.mrb[0].mxu0 %v534
    %v622 = vpop.f32.mrb[0].mxu0
    %v623 = vadd.f32 0.0, %v622
    %v624 = vpop.f32.mrb[0].mxu0
    %v625 = vadd.f32 0.0, %v624
    %626 = vmatprep.mubr.f32.mxu0 0.0
    %627 = vmatmul.mubr.f32.gmra.mrb[0].mxu0 %v536
    %v628 = vpop.f32.mrb[0].mxu0
    %v629 = vadd.f32 0.0, %v628
    %v630 = vpop.f32.mrb[0].mxu0
    %v631 = vadd.f32 0.0, %v630
    %632 = vmatprep.mubr.f32.mxu0 0.0
    %633 = vmatmul.mubr.f32.gmra.mrb[0].mxu0 %v538
    %v634 = vpop.f32.mrb[0].mxu0
    %v635 = vadd.f32 0.0, %v634
    %v636 = vpop.f32.mrb[0].mxu0
    %v637 = vadd.f32 0.0, %v636
    %638 = vdwg.mxu0
    %639 = vmatprep.subr.mxu0 0.0
    %640 = vmatpush1.msra.mxu0 %v548
    %641 = vmatprep.subr.mxu0 0.0
    %642 = vmatpush1.msra.mxu0 0.0
    %643 = vmatprep.subr.mxu0 0.0
    %644 = vmatpush1.msra.mxu0 0.0
    %645 = vmatprep.subr.mxu0 0.0
    %646 = vmatpush1.msra.mxu0 0.0
    %647 = vmatprep.subr.mxu0 0.0
    %648 = vmatpush1.msra.mxu0 0.0
    %649 = vmatprep.subr.mxu0 0.0
    %650 = vmatpush1.msra.mxu0 0.0
    %651 = vmatprep.subr.mxu0 0.0
    %652 = vmatpush1.msra.mxu0 0.0
    %653 = vmatprep.subr.mxu0 0.0
    %654 = vmatpush1.msra.mxu0 0.0
    %655 = vmatprep.subr.mxu0 0.0
    %656 = vmatpush1.msra.mxu0 0.0
    %657 = vmatprep.subr.mxu0 0.0
    %658 = vmatpush1.msra.mxu0 0.0
    %659 = vmatprep.subr.mxu0 0.0
    %660 = vmatpush1.msra.mxu0 0.0
    %661 = vmatprep.subr.mxu0 0.0
    %662 = vmatpush1.msra.mxu0 0.0
    %663 = vmatprep.subr.mxu0 0.0
    %664 = vmatpush1.msra.mxu0 0.0
    %665 = vmatprep.subr.mxu0 0.0
    %666 = vmatpush1.msra.mxu0 0.0
    %667 = vmatprep.subr.mxu0 0.0
    %668 = vmatpush1.msra.mxu0 0.0
    %669 = vmatprep.subr.mxu0 0.0
    %670 = vmatpush1.msra.mxu0 0.0
    %671 = vmatprep.subr.mxu0 0.0
    %672 = vmatpush1.msra.mxu0 0.0
    %673 = vmatprep.subr.mxu0 0.0
    %674 = vmatpush1.msra.mxu0 0.0
    %675 = vmatprep.subr.mxu0 0.0
    %676 = vmatpush1.msra.mxu0 0.0
    %677 = vmatprep.subr.mxu0 0.0
    %678 = vmatpush1.msra.mxu0 0.0
    %679 = vmatprep.subr.mxu0 0.0
    %680 = vmatpush1.msra.mxu0 0.0
    %681 = vmatprep.subr.mxu0 0.0
    %682 = vmatpush1.msra.mxu0 0.0
    %683 = vmatprep.subr.mxu0 0.0
    %684 = vmatpush1.msra.mxu0 0.0
    %685 = vmatprep.subr.mxu0 0.0
    %686 = vmatpush1.msra.mxu0 0.0
    %687 = vmatprep.subr.mxu0 0.0
    %688 = vmatpush1.msra.mxu0 0.0
    %689 = vmatprep.subr.mxu0 0.0
    %690 = vmatpush1.msra.mxu0 0.0
    %691 = vmatprep.subr.mxu0 0.0
    %692 = vmatpush1.msra.mxu0 0.0
    %693 = vmatprep.subr.mxu0 0.0
    %694 = vmatpush1.msra.mxu0 0.0
    %695 = vmatprep.subr.mxu0 0.0
    %696 = vmatpush1.msra.mxu0 0.0
    %697 = vmatprep.subr.mxu0 0.0
    %698 = vmatpush1.msra.mxu0 0.0
    %699 = vmatprep.subr.mxu0 0.0
    %700 = vmatpush1.msra.mxu0 0.0
    %701 = vmatprep.subr.mxu0 0.0
    %702 = vmatpush1.msra.mxu0 0.0
    %703 = vmatprep.mubr.f32.mxu0 0.0
    %704 = vmatmul.mubr.f32.gmra.mrb[0].mxu0 %v532
    %v705 = vpop.f32.mrb[0].mxu0
    %v706 = vadd.f32 0.0, %v705
    %v707 = vpop.f32.mrb[0].mxu0
    %708 = vmatprep.mubr.f32.mxu0 0.0
    %709 = vmatmul.mubr.f32.gmra.mrb[0].mxu0 %v534
    %v710 = vpop.f32.mrb[0].mxu0
    %v711 = vadd.f32 0.0, %v710
    %v712 = vpop.f32.mrb[0].mxu0
    %713 = vmatprep.mubr.f32.mxu0 0.0
    %714 = vmatmul.mubr.f32.gmra.mrb[0].mxu0 %v536
    %v715 = vpop.f32.mrb[0].mxu0
    %v716 = vadd.f32 0.0, %v715
    %v717 = vpop.f32.mrb[0].mxu0
    %718 = vmatprep.mubr.f32.mxu0 0.0
    %719 = vmatmul.mubr.f32.gmra.mrb[0].mxu0 %v538
    %v720 = vpop.f32.mrb[0].mxu0
    %v721 = vadd.f32 0.0, %v720
    %v722 = vpop.f32.mrb[0].mxu0
    %723 = vdwg.mxu0
    %v724 = vsel %vm328, %v515, 0
    %v726 = vsel %vm328, %v516, 0
    %v728 = vsel %vm328, %v517, 0
    %v730 = vsel %vm328, %v518, 0
    %732 = vmatprep.subr.mxu0 %v410
    %733 = vmatpush1.msra.mxu0 %v408
    %734 = vmatprep.subr.mxu0 %v416
    %735 = vmatpush1.msra.mxu0 %v414
    %736 = vmatprep.subr.mxu0 %v422
    %737 = vmatpush1.msra.mxu0 %v420
    %738 = vmatprep.subr.mxu0 %v428
    %739 = vmatpush1.msra.mxu0 %v426
    %740 = vmatprep.subr.mxu0 0.0
    %741 = vmatpush1.msra.mxu0 0.0
    %742 = vmatprep.subr.mxu0 0.0
    %743 = vmatpush1.msra.mxu0 0.0
    %744 = vmatprep.subr.mxu0 0.0
    %745 = vmatpush1.msra.mxu0 0.0
    %746 = vmatprep.subr.mxu0 0.0
    %747 = vmatpush1.msra.mxu0 0.0
    %748 = vmatprep.subr.mxu0 0.0
    %749 = vmatpush1.msra.mxu0 0.0
    %750 = vmatprep.subr.mxu0 0.0
    %751 = vmatpush1.msra.mxu0 0.0
    %752 = vmatprep.subr.mxu0 0.0
    %753 = vmatpush1.msra.mxu0 0.0
    %754 = vmatprep.subr.mxu0 0.0
    %755 = vmatpush1.msra.mxu0 0.0
    %756 = vmatprep.subr.mxu0 0.0
    %757 = vmatpush1.msra.mxu0 0.0
    %758 = vmatprep.subr.mxu0 0.0
    %759 = vmatpush1.msra.mxu0 0.0
    %760 = vmatprep.subr.mxu0 0.0
    %761 = vmatpush1.msra.mxu0 0.0
    %762 = vmatprep.subr.mxu0 0.0
    %763 = vmatpush1.msra.mxu0 0.0
    %764 = vmatprep.subr.mxu0 0.0
    %765 = vmatpush1.msra.mxu0 0.0
    %766 = vmatprep.subr.mxu0 0.0
    %767 = vmatpush1.msra.mxu0 0.0
    %768 = vmatprep.subr.mxu0 0.0
    %769 = vmatpush1.msra.mxu0 0.0
    %770 = vmatprep.subr.mxu0 0.0
    %771 = vmatpush1.msra.mxu0 0.0
    %772 = vmatprep.subr.mxu0 0.0
    %773 = vmatpush1.msra.mxu0 0.0
    %774 = vmatprep.subr.mxu0 0.0
    %775 = vmatpush1.msra.mxu0 0.0
    %776 = vmatprep.subr.mxu0 0.0
    %777 = vmatpush1.msra.mxu0 0.0
    %778 = vmatprep.subr.mxu0 0.0
    %779 = vmatpush1.msra.mxu0 0.0
    %780 = vmatprep.subr.mxu0 0.0
    %781 = vmatpush1.msra.mxu0 0.0
    %782 = vmatprep.subr.mxu0 0.0
    %783 = vmatpush1.msra.mxu0 0.0
    %784 = vmatprep.subr.mxu0 0.0
    %785 = vmatpush1.msra.mxu0 0.0
    %786 = vmatprep.subr.mxu0 0.0
    %787 = vmatpush1.msra.mxu0 0.0
    %788 = vmatprep.subr.mxu0 0.0
    %789 = vmatpush1.msra.mxu0 0.0
    %790 = vmatprep.subr.mxu0 0.0
    %791 = vmatpush1.msra.mxu0 0.0
    %792 = vmatprep.subr.mxu0 0.0
    %793 = vmatpush1.msra.mxu0 0.0
    %794 = vmatprep.subr.mxu0 0.0
    %795 = vmatpush1.msra.mxu0 0.0
    %796 = vmatprep.mubr.f32.mxu0 0.0
    %797 = vmatmul.mubr.f32.gmra.mrb[0].mxu0 %v724
    %v798 = vpop.f32.mrb[0].mxu0
    %v799 = vadd.f32 %v617, %v798
    %v800 = vpop.f32.mrb[0].mxu0
    %v801 = vadd.f32 %v619, %v800
    %802 = vmatprep.mubr.f32.mxu0 0.0
    %803 = vmatmul.mubr.f32.gmra.mrb[0].mxu0 %v726
    %v804 = vpop.f32.mrb[0].mxu0
    %v805 = vadd.f32 %v623, %v804
    %v806 = vpop.f32.mrb[0].mxu0
    %v807 = vadd.f32 %v625, %v806
    %808 = vmatprep.mubr.f32.mxu0 0.0
    %809 = vmatmul.mubr.f32.gmra.mrb[0].mxu0 %v728
    %v810 = vpop.f32.mrb[0].mxu0
    %v811 = vadd.f32 %v629, %v810
    %v812 = vpop.f32.mrb[0].mxu0
    %v813 = vadd.f32 %v631, %v812
    %814 = vmatprep.mubr.f32.mxu0 0.0
    %815 = vmatmul.mubr.f32.gmra.mrb[0].mxu0 %v730
    %v816 = vpop.f32.mrb[0].mxu0
    %v817 = vadd.f32 %v635, %v816
    %v818 = vpop.f32.mrb[0].mxu0
    %v819 = vadd.f32 %v637, %v818
    %820 = vdwg.mxu0
    %821 = vmatprep.subr.mxu0 0.0
    %822 = vmatpush1.msra.mxu0 %v497
    %823 = vmatprep.subr.mxu0 0.0
    %824 = vmatpush1.msra.mxu0 %v502
    %825 = vmatprep.subr.mxu0 0.0
    %826 = vmatpush1.msra.mxu0 %v507
    %827 = vmatprep.subr.mxu0 0.0
    %828 = vmatpush1.msra.mxu0 %v512
    %829 = vmatprep.subr.mxu0 0.0
    %830 = vmatpush1.msra.mxu0 0.0
    %831 = vmatprep.subr.mxu0 0.0
    %832 = vmatpush1.msra.mxu0 0.0
    %833 = vmatprep.subr.mxu0 0.0
    %834 = vmatpush1.msra.mxu0 0.0
    %835 = vmatprep.subr.mxu0 0.0
    %836 = vmatpush1.msra.mxu0 0.0
    %837 = vmatprep.subr.mxu0 0.0
    %838 = vmatpush1.msra.mxu0 0.0
    %839 = vmatprep.subr.mxu0 0.0
    %840 = vmatpush1.msra.mxu0 0.0
    %841 = vmatprep.subr.mxu0 0.0
    %842 = vmatpush1.msra.mxu0 0.0
    %843 = vmatprep.subr.mxu0 0.0
    %844 = vmatpush1.msra.mxu0 0.0
    %845 = vmatprep.subr.mxu0 0.0
    %846 = vmatpush1.msra.mxu0 0.0
    %847 = vmatprep.subr.mxu0 0.0
    %848 = vmatpush1.msra.mxu0 0.0
    %849 = vmatprep.subr.mxu0 0.0
    %850 = vmatpush1.msra.mxu0 0.0
    %851 = vmatprep.subr.mxu0 0.0
    %852 = vmatpush1.msra.mxu0 0.0
    %853 = vmatprep.subr.mxu0 0.0
    %854 = vmatpush1.msra.mxu0 0.0
    %855 = vmatprep.subr.mxu0 0.0
    %856 = vmatpush1.msra.mxu0 0.0
    %857 = vmatprep.subr.mxu0 0.0
    %858 = vmatpush1.msra.mxu0 0.0
    %859 = vmatprep.subr.mxu0 0.0
    %860 = vmatpush1.msra.mxu0 0.0
    %861 = vmatprep.subr.mxu0 0.0
    %862 = vmatpush1.msra.mxu0 0.0
    %863 = vmatprep.subr.mxu0 0.0
    %864 = vmatpush1.msra.mxu0 0.0
    %865 = vmatprep.subr.mxu0 0.0
    %866 = vmatpush1.msra.mxu0 0.0
    %867 = vmatprep.subr.mxu0 0.0
    %868 = vmatpush1.msra.mxu0 0.0
    %869 = vmatprep.subr.mxu0 0.0
    %870 = vmatpush1.msra.mxu0 0.0
    %871 = vmatprep.subr.mxu0 0.0
    %872 = vmatpush1.msra.mxu0 0.0
    %873 = vmatprep.subr.mxu0 0.0
    %874 = vmatpush1.msra.mxu0 0.0
    %875 = vmatprep.subr.mxu0 0.0
    %876 = vmatpush1.msra.mxu0 0.0
    %877 = vmatprep.subr.mxu0 0.0
    %878 = vmatpush1.msra.mxu0 0.0
    %879 = vmatprep.subr.mxu0 0.0
    %880 = vmatpush1.msra.mxu0 0.0
    %881 = vmatprep.subr.mxu0 0.0
    %882 = vmatpush1.msra.mxu0 0.0
    %883 = vmatprep.subr.mxu0 0.0
    %884 = vmatpush1.msra.mxu0 0.0
    %885 = vmatprep.mubr.f32.mxu0 0.0
    %886 = vmatmul.mubr.f32.gmra.mrb[0].mxu0 %v724
    %v887 = vpop.f32.mrb[0].mxu0
    %v888 = vadd.f32 %v706, %v887
    %v889 = vpop.f32.mrb[0].mxu0
    %890 = vmatprep.mubr.f32.mxu0 0.0
    %891 = vmatmul.mubr.f32.gmra.mrb[0].mxu0 %v726
    %v892 = vpop.f32.mrb[0].mxu0
    %v893 = vadd.f32 %v711, %v892
    %v894 = vpop.f32.mrb[0].mxu0
    %895 = vmatprep.mubr.f32.mxu0 0.0
    %896 = vmatmul.mubr.f32.gmra.mrb[0].mxu0 %v728
    %v897 = vpop.f32.mrb[0].mxu0
    %v898 = vadd.f32 %v716, %v897
    %v899 = vpop.f32.mrb[0].mxu0
    %900 = vmatprep.mubr.f32.mxu0 0.0
    %901 = vmatmul.mubr.f32.gmra.mrb[0].mxu0 %v730
    %v902 = vpop.f32.mrb[0].mxu0
    %v903 = vadd.f32 %v721, %v902
    %v904 = vpop.f32.mrb[0].mxu0
    %905 = vdwg.mxu0
    %906 = vset.pattern.permute.xlu0 2
    %907 = vperm.xlu0 %906, %v80
    %v908 = vpop.permute.xlu0 %907
    %910 = vset.pattern.permute.xlu0 2
    %911 = vperm.xlu0 %910, %v81
    %v912 = vpop.permute.xlu0 %911
    %914 = vset.pattern.permute.xlu0 2
    %915 = vperm.xlu0 %914, %v82
    %v916 = vpop.permute.xlu0 %915
    %918 = vset.pattern.permute.xlu0 2
    %919 = vperm.xlu0 %918, %v83
    %v920 = vpop.permute.xlu0 %919
    %v922 = vadd.f32 %v799, %v908
    %v923 = vadd.f32 %v801, %v908
    %v924 = vadd.f32 %v888, %v908
    %v925 = vadd.f32 %v805, %v912
    %v926 = vadd.f32 %v807, %v912
    %v927 = vadd.f32 %v893, %v912
    %v928 = vadd.f32 %v811, %v916
    %v929 = vadd.f32 %v813, %v916
    %v930 = vadd.f32 %v898, %v916
    %v931 = vadd.f32 %v817, %v920
    %v932 = vadd.f32 %v819, %v920
    %v933 = vadd.f32 %v903, %v920
    %v934 = vtanh.pop %v922
    %v935 = vtanh.pop %v923
    %v936 = vtanh.pop %v924
    %v937 = vtanh.pop %v925
    %v938 = vtanh.pop %v926
    %v939 = vtanh.pop %v927
    %v940 = vtanh.pop %v928
    %v941 = vtanh.pop %v929
    %v942 = vtanh.pop %v930
    %v943 = vtanh.pop %v931
    %v944 = vtanh.pop %v932
    %v945 = vtanh.pop %v933
    %v946 = vld [vmem:[#allocation7] sm:$0xff]
    %v947 = vld [vmem:[#allocation7 + $0x8] sm:$0xff]
    %v948 = vld [vmem:[#allocation7 + $0x10] sm:$0xff]
    %v949 = vld [vmem:[#allocation7 + $0x18] sm:$0xff]
    %950 = vset.pattern.permute.xlu0 3
    %951 = vperm.xlu0 %950, %v80
    %v952 = vpop.permute.xlu0 %951
    %954 = vset.pattern.permute.xlu0 3
    %955 = vperm.xlu0 %954, %v81
    %v956 = vpop.permute.xlu0 %955
    %958 = vset.pattern.permute.xlu0 3
    %959 = vperm.xlu0 %958, %v82
    %v960 = vpop.permute.xlu0 %959
    %962 = vset.pattern.permute.xlu0 3
    %963 = vperm.xlu0 %962, %v83
    %v964 = vpop.permute.xlu0 %963
    %v967 = vsel %vm328, %v946, 0
    %v970 = vsel %vm328, %v947, 0
    %v973 = vsel %vm328, %v948, 0
    %v976 = vsel %vm328, %v949, 0
    %978 = vmatprep.subr.mxu0 %v935
    %979 = vmatpush1.msra.mxu0 %v934
    %980 = vmatprep.subr.mxu0 %v938
    %981 = vmatpush1.msra.mxu0 %v937
    %982 = vmatprep.subr.mxu0 %v941
    %983 = vmatpush1.msra.mxu0 %v940
    %984 = vmatprep.subr.mxu0 %v944
    %985 = vmatpush1.msra.mxu0 %v943
    %986 = vmatprep.subr.mxu0 0.0
    %987 = vmatpush1.msra.mxu0 0.0
    %988 = vmatprep.subr.mxu0 0.0
    %989 = vmatpush1.msra.mxu0 0.0
    %990 = vmatprep.subr.mxu0 0.0
    %991 = vmatpush1.msra.mxu0 0.0
    %992 = vmatprep.subr.mxu0 0.0
    %993 = vmatpush1.msra.mxu0 0.0
    %994 = vmatprep.subr.mxu0 0.0
    %995 = vmatpush1.msra.mxu0 0.0
    %996 = vmatprep.subr.mxu0 0.0
    %997 = vmatpush1.msra.mxu0 0.0
    %998 = vmatprep.subr.mxu0 0.0
    %999 = vmatpush1.msra.mxu0 0.0
    %1000 = vmatprep.subr.mxu0 0.0
    %1001 = vmatpush1.msra.mxu0 0.0
    %1002 = vmatprep.subr.mxu0 0.0
    %1003 = vmatpush1.msra.mxu0 0.0
    %1004 = vmatprep.subr.mxu0 0.0
    %1005 = vmatpush1.msra.mxu0 0.0
    %1006 = vmatprep.subr.mxu0 0.0
    %1007 = vmatpush1.msra.mxu0 0.0
    %1008 = vmatprep.subr.mxu0 0.0
    %1009 = vmatpush1.msra.mxu0 0.0
    %1010 = vmatprep.subr.mxu0 0.0
    %1011 = vmatpush1.msra.mxu0 0.0
    %1012 = vmatprep.subr.mxu0 0.0
    %1013 = vmatpush1.msra.mxu0 0.0
    %1014 = vmatprep.subr.mxu0 0.0
    %1015 = vmatpush1.msra.mxu0 0.0
    %1016 = vmatprep.subr.mxu0 0.0
    %1017 = vmatpush1.msra.mxu0 0.0
    %1018 = vmatprep.subr.mxu0 0.0
    %1019 = vmatpush1.msra.mxu0 0.0
    %1020 = vmatprep.subr.mxu0 0.0
    %1021 = vmatpush1.msra.mxu0 0.0
    %1022 = vmatprep.subr.mxu0 0.0
    %1023 = vmatpush1.msra.mxu0 0.0
    %1024 = vmatprep.subr.mxu0 0.0
    %1025 = vmatpush1.msra.mxu0 0.0
    %1026 = vmatprep.subr.mxu0 0.0
    %1027 = vmatpush1.msra.mxu0 0.0
    %1028 = vmatprep.subr.mxu0 0.0
    %1029 = vmatpush1.msra.mxu0 0.0
    %1030 = vmatprep.subr.mxu0 0.0
    %1031 = vmatpush1.msra.mxu0 0.0
    %1032 = vmatprep.subr.mxu0 0.0
    %1033 = vmatpush1.msra.mxu0 0.0
    %1034 = vmatprep.subr.mxu0 0.0
    %1035 = vmatpush1.msra.mxu0 0.0
    %1036 = vmatprep.subr.mxu0 0.0
    %1037 = vmatpush1.msra.mxu0 0.0
    %1038 = vmatprep.subr.mxu0 0.0
    %1039 = vmatpush1.msra.mxu0 0.0
    %1040 = vmatprep.subr.mxu0 0.0
    %1041 = vmatpush1.msra.mxu0 0.0
    %1042 = vmatprep.mubr.f32.mxu0 0.0
    %1043 = vmatmul.mubr.f32.gmra.mrb[0].mxu0 %v967
    %v1044 = vpop.f32.mrb[0].mxu0
    %v1045 = vadd.f32 %v952, %v1044
    %v1046 = vpop.f32.mrb[0].mxu0
    %v1047 = vadd.f32 %v952, %v1046
    %1048 = vmatprep.mubr.f32.mxu0 0.0
    %1049 = vmatmul.mubr.f32.gmra.mrb[0].mxu0 %v970
    %v1050 = vpop.f32.mrb[0].mxu0
    %v1051 = vadd.f32 %v956, %v1050
    %v1052 = vpop.f32.mrb[0].mxu0
    %v1053 = vadd.f32 %v956, %v1052
    %1054 = vmatprep.mubr.f32.mxu0 0.0
    %1055 = vmatmul.mubr.f32.gmra.mrb[0].mxu0 %v973
    %v1056 = vpop.f32.mrb[0].mxu0
    %v1057 = vadd.f32 %v960, %v1056
    %v1058 = vpop.f32.mrb[0].mxu0
    %v1059 = vadd.f32 %v960, %v1058
    %1060 = vmatprep.mubr.f32.mxu0 0.0
    %1061 = vmatmul.mubr.f32.gmra.mrb[0].mxu0 %v976
    %v1062 = vpop.f32.mrb[0].mxu0
    %v1063 = vadd.f32 %v964, %v1062
    %v1064 = vpop.f32.mrb[0].mxu0
    %v1065 = vadd.f32 %v964, %v1064
    %1066 = vdwg.mxu0
    %1067 = vmatprep.subr.mxu0 0.0
    %1068 = vmatpush1.msra.mxu0 %v936
    %1069 = vmatprep.subr.mxu0 0.0
    %1070 = vmatpush1.msra.mxu0 %v939
    %1071 = vmatprep.subr.mxu0 0.0
    %1072 = vmatpush1.msra.mxu0 %v942
    %1073 = vmatprep.subr.mxu0 0.0
    %1074 = vmatpush1.msra.mxu0 %v945
    %1075 = vmatprep.subr.mxu0 0.0
    %1076 = vmatpush1.msra.mxu0 0.0
    %1077 = vmatprep.subr.mxu0 0.0
    %1078 = vmatpush1.msra.mxu0 0.0
    %1079 = vmatprep.subr.mxu0 0.0
    %1080 = vmatpush1.msra.mxu0 0.0
    %1081 = vmatprep.subr.mxu0 0.0
    %1082 = vmatpush1.msra.mxu0 0.0
    %1083 = vmatprep.subr.mxu0 0.0
    %1084 = vmatpush1.msra.mxu0 0.0
    %1085 = vmatprep.subr.mxu0 0.0
    %1086 = vmatpush1.msra.mxu0 0.0
    %1087 = vmatprep.subr.mxu0 0.0
    %1088 = vmatpush1.msra.mxu0 0.0
    %1089 = vmatprep.subr.mxu0 0.0
    %1090 = vmatpush1.msra.mxu0 0.0
    %1091 = vmatprep.subr.mxu0 0.0
    %1092 = vmatpush1.msra.mxu0 0.0
    %1093 = vmatprep.subr.mxu0 0.0
    %1094 = vmatpush1.msra.mxu0 0.0
    %1095 = vmatprep.subr.mxu0 0.0
    %1096 = vmatpush1.msra.mxu0 0.0
    %1097 = vmatprep.subr.mxu0 0.0
    %1098 = vmatpush1.msra.mxu0 0.0
    %1099 = vmatprep.subr.mxu0 0.0
    %1100 = vmatpush1.msra.mxu0 0.0
    %1101 = vmatprep.subr.mxu0 0.0
    %1102 = vmatpush1.msra.mxu0 0.0
    %1103 = vmatprep.subr.mxu0 0.0
    %1104 = vmatpush1.msra.mxu0 0.0
    %1105 = vmatprep.subr.mxu0 0.0
    %1106 = vmatpush1.msra.mxu0 0.0
    %1107 = vmatprep.subr.mxu0 0.0
    %1108 = vmatpush1.msra.mxu0 0.0
    %1109 = vmatprep.subr.mxu0 0.0
    %1110 = vmatpush1.msra.mxu0 0.0
    %1111 = vmatprep.subr.mxu0 0.0
    %1112 = vmatpush1.msra.mxu0 0.0
    %1113 = vmatprep.subr.mxu0 0.0
    %1114 = vmatpush1.msra.mxu0 0.0
    %1115 = vmatprep.subr.mxu0 0.0
    %1116 = vmatpush1.msra.mxu0 0.0
    %1117 = vmatprep.subr.mxu0 0.0
    %1118 = vmatpush1.msra.mxu0 0.0
    %1119 = vmatprep.subr.mxu0 0.0
    %1120 = vmatpush1.msra.mxu0 0.0
    %1121 = vmatprep.subr.mxu0 0.0
    %1122 = vmatpush1.msra.mxu0 0.0
    %1123 = vmatprep.subr.mxu0 0.0
    %1124 = vmatpush1.msra.mxu0 0.0
    %1125 = vmatprep.subr.mxu0 0.0
    %1126 = vmatpush1.msra.mxu0 0.0
    %1127 = vmatprep.subr.mxu0 0.0
    %1128 = vmatpush1.msra.mxu0 0.0
    %1129 = vmatprep.subr.mxu0 0.0
    %1130 = vmatpush1.msra.mxu0 0.0
    %1131 = vmatprep.mubr.f32.mxu0 0.0
    %1132 = vmatmul.mubr.f32.gmra.mrb[0].mxu0 %v967
    %v1133 = vpop.f32.mrb[0].mxu0
    %v1134 = vadd.f32 %v952, %v1133
    %v1135 = vpop.f32.mrb[0].mxu0
    %1136 = vmatprep.mubr.f32.mxu0 0.0
    %1137 = vmatmul.mubr.f32.gmra.mrb[0].mxu0 %v970
    %v1138 = vpop.f32.mrb[0].mxu0
    %v1139 = vadd.f32 %v956, %v1138
    %v1140 = vpop.f32.mrb[0].mxu0
    %1141 = vmatprep.mubr.f32.mxu0 0.0
    %1142 = vmatmul.mubr.f32.gmra.mrb[0].mxu0 %v973
    %v1143 = vpop.f32.mrb[0].mxu0
    %v1144 = vadd.f32 %v960, %v1143
    %v1145 = vpop.f32.mrb[0].mxu0
    %1146 = vmatprep.mubr.f32.mxu0 0.0
    %1147 = vmatmul.mubr.f32.gmra.mrb[0].mxu0 %v976
    %v1148 = vpop.f32.mrb[0].mxu0
    %v1149 = vadd.f32 %v964, %v1148
    %v1150 = vpop.f32.mrb[0].mxu0
    %1151 = vdwg.mxu0
    %v1152 = vtanh.pop %v1045
    %v1153 = vtanh.pop %v1047
    %v1154 = vtanh.pop %v1134
    %v1155 = vtanh.pop %v1051
    %v1156 = vtanh.pop %v1053
    %v1157 = vtanh.pop %v1139
    %v1158 = vtanh.pop %v1057
    %v1159 = vtanh.pop %v1059
    %v1160 = vtanh.pop %v1144
    %v1161 = vtanh.pop %v1063
    %v1162 = vtanh.pop %v1065
    %v1163 = vtanh.pop %v1149
    %v1164 = vld [vmem:[%s5] sm:$0xff]
    %v1165 = vld [vmem:[%s5 + $0x8] sm:$0xff]
    %v1166 = vld [vmem:[%s5 + $0x10] sm:$0xff]
    %v1167 = vld [vmem:[%s5 + $0x18] sm:$0xff]
    %1168 = vset.pattern.permute.xlu0 4
    %1169 = vperm.xlu0 %1168, %v80
    %v1170 = vpop.permute.xlu0 %1169
    %1172 = vset.pattern.permute.xlu0 4
    %1173 = vperm.xlu0 %1172, %v81
    %v1174 = vpop.permute.xlu0 %1173
    %1176 = vset.pattern.permute.xlu0 4
    %1177 = vperm.xlu0 %1176, %v82
    %v1178 = vpop.permute.xlu0 %1177
    %1180 = vset.pattern.permute.xlu0 4
    %1181 = vperm.xlu0 %1180, %v83
    %v1182 = vpop.permute.xlu0 %1181
    %v1185 = vsel %vm328, %v1164, 0
    %v1188 = vsel %vm328, %v1165, 0
    %v1191 = vsel %vm328, %v1166, 0
    %v1194 = vsel %vm328, %v1167, 0
    %1196 = vmatprep.subr.mxu0 %v1153
    %1197 = vmatpush1.msra.mxu0 %v1152
    %1198 = vmatprep.subr.mxu0 %v1156
    %1199 = vmatpush1.msra.mxu0 %v1155
    %1200 = vmatprep.subr.mxu0 %v1159
    %1201 = vmatpush1.msra.mxu0 %v1158
    %1202 = vmatprep.subr.mxu0 %v1162
    %1203 = vmatpush1.msra.mxu0 %v1161
    %1204 = vmatprep.subr.mxu0 0.0
    %1205 = vmatpush1.msra.mxu0 0.0
    %1206 = vmatprep.subr.mxu0 0.0
    %1207 = vmatpush1.msra.mxu0 0.0
    %1208 = vmatprep.subr.mxu0 0.0
    %1209 = vmatpush1.msra.mxu0 0.0
    %1210 = vmatprep.subr.mxu0 0.0
    %1211 = vmatpush1.msra.mxu0 0.0
    %1212 = vmatprep.subr.mxu0 0.0
    %1213 = vmatpush1.msra.mxu0 0.0
    %1214 = vmatprep.subr.mxu0 0.0
    %1215 = vmatpush1.msra.mxu0 0.0
    %1216 = vmatprep.subr.mxu0 0.0
    %1217 = vmatpush1.msra.mxu0 0.0
    %1218 = vmatprep.subr.mxu0 0.0
    %1219 = vmatpush1.msra.mxu0 0.0
    %1220 = vmatprep.subr.mxu0 0.0
    %1221 = vmatpush1.msra.mxu0 0.0
    %1222 = vmatprep.subr.mxu0 0.0
    %1223 = vmatpush1.msra.mxu0 0.0
    %1224 = vmatprep.subr.mxu0 0.0
    %1225 = vmatpush1.msra.mxu0 0.0
    %1226 = vmatprep.subr.mxu0 0.0
    %1227 = vmatpush1.msra.mxu0 0.0
    %1228 = vmatprep.subr.mxu0 0.0
    %1229 = vmatpush1.msra.mxu0 0.0
    %1230 = vmatprep.subr.mxu0 0.0
    %1231 = vmatpush1.msra.mxu0 0.0
    %1232 = vmatprep.subr.mxu0 0.0
    %1233 = vmatpush1.msra.mxu0 0.0
    %1234 = vmatprep.subr.mxu0 0.0
    %1235 = vmatpush1.msra.mxu0 0.0
    %1236 = vmatprep.subr.mxu0 0.0
    %1237 = vmatpush1.msra.mxu0 0.0
    %1238 = vmatprep.subr.mxu0 0.0
    %1239 = vmatpush1.msra.mxu0 0.0
    %1240 = vmatprep.subr.mxu0 0.0
    %1241 = vmatpush1.msra.mxu0 0.0
    %1242 = vmatprep.subr.mxu0 0.0
    %1243 = vmatpush1.msra.mxu0 0.0
    %1244 = vmatprep.subr.mxu0 0.0
    %1245 = vmatpush1.msra.mxu0 0.0
    %1246 = vmatprep.subr.mxu0 0.0
    %1247 = vmatpush1.msra.mxu0 0.0
    %1248 = vmatprep.subr.mxu0 0.0
    %1249 = vmatpush1.msra.mxu0 0.0
    %1250 = vmatprep.subr.mxu0 0.0
    %1251 = vmatpush1.msra.mxu0 0.0
    %1252 = vmatprep.subr.mxu0 0.0
    %1253 = vmatpush1.msra.mxu0 0.0
    %1254 = vmatprep.subr.mxu0 0.0
    %1255 = vmatpush1.msra.mxu0 0.0
    %1256 = vmatprep.subr.mxu0 0.0
    %1257 = vmatpush1.msra.mxu0 0.0
    %1258 = vmatprep.subr.mxu0 0.0
    %1259 = vmatpush1.msra.mxu0 0.0
    %1260 = vmatprep.mubr.f32.mxu0 0.0
    %1261 = vmatmul.mubr.f32.gmra.mrb[0].mxu0 %v1185
    %v1262 = vpop.f32.mrb[0].mxu0
    %v1263 = vadd.f32 %v1170, %v1262
    %v1264 = vpop.f32.mrb[0].mxu0
    %v1265 = vadd.f32 %v1170, %v1264
    %1266 = vmatprep.mubr.f32.mxu0 0.0
    %1267 = vmatmul.mubr.f32.gmra.mrb[0].mxu0 %v1188
    %v1268 = vpop.f32.mrb[0].mxu0
    %v1269 = vadd.f32 %v1174, %v1268
    %v1270 = vpop.f32.mrb[0].mxu0
    %v1271 = vadd.f32 %v1174, %v1270
    %1272 = vmatprep.mubr.f32.mxu0 0.0
    %1273 = vmatmul.mubr.f32.gmra.mrb[0].mxu0 %v1191
    %v1274 = vpop.f32.mrb[0].mxu0
    %v1275 = vadd.f32 %v1178, %v1274
    %v1276 = vpop.f32.mrb[0].mxu0
    %v1277 = vadd.f32 %v1178, %v1276
    %1278 = vmatprep.mubr.f32.mxu0 0.0
    %1279 = vmatmul.mubr.f32.gmra.mrb[0].mxu0 %v1194
    %v1280 = vpop.f32.mrb[0].mxu0
    %v1281 = vadd.f32 %v1182, %v1280
    %v1282 = vpop.f32.mrb[0].mxu0
    %v1283 = vadd.f32 %v1182, %v1282
    %1284 = vdwg.mxu0
    %1285 = vmatprep.subr.mxu0 0.0
    %1286 = vmatpush1.msra.mxu0 %v1154
    %1287 = vmatprep.subr.mxu0 0.0
    %1288 = vmatpush1.msra.mxu0 %v1157
    %1289 = vmatprep.subr.mxu0 0.0
    %1290 = vmatpush1.msra.mxu0 %v1160
    %1291 = vmatprep.subr.mxu0 0.0
    %1292 = vmatpush1.msra.mxu0 %v1163
    %1293 = vmatprep.subr.mxu0 0.0
    %1294 = vmatpush1.msra.mxu0 0.0
    %1295 = vmatprep.subr.mxu0 0.0
    %1296 = vmatpush1.msra.mxu0 0.0
    %1297 = vmatprep.subr.mxu0 0.0
    %1298 = vmatpush1.msra.mxu0 0.0
    %1299 = vmatprep.subr.mxu0 0.0
    %1300 = vmatpush1.msra.mxu0 0.0
    %1301 = vmatprep.subr.mxu0 0.0
    %1302 = vmatpush1.msra.mxu0 0.0
    %1303 = vmatprep.subr.mxu0 0.0
    %1304 = vmatpush1.msra.mxu0 0.0
    %1305 = vmatprep.subr.mxu0 0.0
    %1306 = vmatpush1.msra.mxu0 0.0
    %1307 = vmatprep.subr.mxu0 0.0
    %1308 = vmatpush1.msra.mxu0 0.0
    %1309 = vmatprep.subr.mxu0 0.0
    %1310 = vmatpush1.msra.mxu0 0.0
    %1311 = vmatprep.subr.mxu0 0.0
    %1312 = vmatpush1.msra.mxu0 0.0
    %1313 = vmatprep.subr.mxu0 0.0
    %1314 = vmatpush1.msra.mxu0 0.0
    %1315 = vmatprep.subr.mxu0 0.0
    %1316 = vmatpush1.msra.mxu0 0.0
    %1317 = vmatprep.subr.mxu0 0.0
    %1318 = vmatpush1.msra.mxu0 0.0
    %1319 = vmatprep.subr.mxu0 0.0
    %1320 = vmatpush1.msra.mxu0 0.0
    %1321 = vmatprep.subr.mxu0 0.0
    %1322 = vmatpush1.msra.mxu0 0.0
    %1323 = vmatprep.subr.mxu0 0.0
    %1324 = vmatpush1.msra.mxu0 0.0
    %1325 = vmatprep.subr.mxu0 0.0
    %1326 = vmatpush1.msra.mxu0 0.0
    %1327 = vmatprep.subr.mxu0 0.0
    %1328 = vmatpush1.msra.mxu0 0.0
    %1329 = vmatprep.subr.mxu0 0.0
    %1330 = vmatpush1.msra.mxu0 0.0
    %1331 = vmatprep.subr.mxu0 0.0
    %1332 = vmatpush1.msra.mxu0 0.0
    %1333 = vmatprep.subr.mxu0 0.0
    %1334 = vmatpush1.msra.mxu0 0.0
    %1335 = vmatprep.subr.mxu0 0.0
    %1336 = vmatpush1.msra.mxu0 0.0
    %1337 = vmatprep.subr.mxu0 0.0
    %1338 = vmatpush1.msra.mxu0 0.0
    %1339 = vmatprep.subr.mxu0 0.0
    %1340 = vmatpush1.msra.mxu0 0.0
    %1341 = vmatprep.subr.mxu0 0.0
    %1342 = vmatpush1.msra.mxu0 0.0
    %1343 = vmatprep.subr.mxu0 0.0
    %1344 = vmatpush1.msra.mxu0 0.0
    %1345 = vmatprep.subr.mxu0 0.0
    %1346 = vmatpush1.msra.mxu0 0.0
    %1347 = vmatprep.subr.mxu0 0.0
    %1348 = vmatpush1.msra.mxu0 0.0
    %1349 = vmatprep.mubr.f32.mxu0 0.0
    %1350 = vmatmul.mubr.f32.gmra.mrb[0].mxu0 %v1185
    %v1351 = vpop.f32.mrb[0].mxu0
    %v1352 = vadd.f32 %v1170, %v1351
    %v1353 = vpop.f32.mrb[0].mxu0
    %1354 = vmatprep.mubr.f32.mxu0 0.0
    %1355 = vmatmul.mubr.f32.gmra.mrb[0].mxu0 %v1188
    %v1356 = vpop.f32.mrb[0].mxu0
    %v1357 = vadd.f32 %v1174, %v1356
    %v1358 = vpop.f32.mrb[0].mxu0
    %1359 = vmatprep.mubr.f32.mxu0 0.0
    %1360 = vmatmul.mubr.f32.gmra.mrb[0].mxu0 %v1191
    %v1361 = vpop.f32.mrb[0].mxu0
    %v1362 = vadd.f32 %v1178, %v1361
    %v1363 = vpop.f32.mrb[0].mxu0
    %1364 = vmatprep.mubr.f32.mxu0 0.0
    %1365 = vmatmul.mubr.f32.gmra.mrb[0].mxu0 %v1194
    %v1366 = vpop.f32.mrb[0].mxu0
    %v1367 = vadd.f32 %v1182, %v1366
    %v1368 = vpop.f32.mrb[0].mxu0
    %1369 = vdwg.mxu0
    %v1370 = vtanh.pop %v1263
    %v1371 = vtanh.pop %v1265
    %v1372 = vtanh.pop %v1352
    %v1373 = vtanh.pop %v1269
    %v1374 = vtanh.pop %v1271
    %v1375 = vtanh.pop %v1357
    %v1376 = vtanh.pop %v1275
    %v1377 = vtanh.pop %v1277
    %v1378 = vtanh.pop %v1362
    %v1379 = vtanh.pop %v1281
    %v1380 = vtanh.pop %v1283
    %v1381 = vtanh.pop %v1367
    %v1382 = vld [vmem:[%s6] sm:$0x1]
    %1384 = vset.pattern.permute.xlu0 5
    %1385 = vperm.xlu0 %1384, %v84
    %v1386 = vpop.permute.xlu0 %1385
    %v1389 = vsel %vm328, %v1382, 0
    %1391 = vmatprep.subr.mxu0 %v1371
    %1392 = vmatpush1.msra.mxu0 %v1370
    %1393 = vmatprep.subr.mxu0 %v1374
    %1394 = vmatpush1.msra.mxu0 %v1373
    %1395 = vmatprep.subr.mxu0 %v1377
    %1396 = vmatpush1.msra.mxu0 %v1376
    %1397 = vmatprep.subr.mxu0 %v1380
    %1398 = vmatpush1.msra.mxu0 %v1379
    %1399 = vmatprep.subr.mxu0 0.0
    %1400 = vmatpush1.msra.mxu0 0.0
    %1401 = vmatprep.subr.mxu0 0.0
    %1402 = vmatpush1.msra.mxu0 0.0
    %1403 = vmatprep.subr.mxu0 0.0
    %1404 = vmatpush1.msra.mxu0 0.0
    %1405 = vmatprep.subr.mxu0 0.0
    %1406 = vmatpush1.msra.mxu0 0.0
    %1407 = vmatprep.subr.mxu0 0.0
    %1408 = vmatpush1.msra.mxu0 0.0
    %1409 = vmatprep.subr.mxu0 0.0
    %1410 = vmatpush1.msra.mxu0 0.0
    %1411 = vmatprep.subr.mxu0 0.0
    %1412 = vmatpush1.msra.mxu0 0.0
    %1413 = vmatprep.subr.mxu0 0.0
    %1414 = vmatpush1.msra.mxu0 0.0
    %1415 = vmatprep.subr.mxu0 0.0
    %1416 = vmatpush1.msra.mxu0 0.0
    %1417 = vmatprep.subr.mxu0 0.0
    %1418 = vmatpush1.msra.mxu0 0.0
    %1419 = vmatprep.subr.mxu0 0.0
    %1420 = vmatpush1.msra.mxu0 0.0
    %1421 = vmatprep.subr.mxu0 0.0
    %1422 = vmatpush1.msra.mxu0 0.0
    %1423 = vmatprep.subr.mxu0 0.0
    %1424 = vmatpush1.msra.mxu0 0.0
    %1425 = vmatprep.subr.mxu0 0.0
    %1426 = vmatpush1.msra.mxu0 0.0
    %1427 = vmatprep.subr.mxu0 0.0
    %1428 = vmatpush1.msra.mxu0 0.0
    %1429 = vmatprep.subr.mxu0 0.0
    %1430 = vmatpush1.msra.mxu0 0.0
    %1431 = vmatprep.subr.mxu0 0.0
    %1432 = vmatpush1.msra.mxu0 0.0
    %1433 = vmatprep.subr.mxu0 0.0
    %1434 = vmatpush1.msra.mxu0 0.0
    %1435 = vmatprep.subr.mxu0 0.0
    %1436 = vmatpush1.msra.mxu0 0.0
    %1437 = vmatprep.subr.mxu0 0.0
    %1438 = vmatpush1.msra.mxu0 0.0
    %1439 = vmatprep.subr.mxu0 0.0
    %1440 = vmatpush1.msra.mxu0 0.0
    %1441 = vmatprep.subr.mxu0 0.0
    %1442 = vmatpush1.msra.mxu0 0.0
    %1443 = vmatprep.subr.mxu0 0.0
    %1444 = vmatpush1.msra.mxu0 0.0
    %1445 = vmatprep.subr.mxu0 0.0
    %1446 = vmatpush1.msra.mxu0 0.0
    %1447 = vmatprep.subr.mxu0 0.0
    %1448 = vmatpush1.msra.mxu0 0.0
    %1449 = vmatprep.subr.mxu0 0.0
    %1450 = vmatpush1.msra.mxu0 0.0
    %1451 = vmatprep.subr.mxu0 0.0
    %1452 = vmatpush1.msra.mxu0 0.0
    %1453 = vmatprep.subr.mxu0 0.0
    %1454 = vmatpush1.msra.mxu0 0.0
    %1455 = vmatprep.mubr.f32.mxu0 0.0
    %1456 = vmatmul.mubr.f32.gmra.mrb[0].mxu0 %v1389
    %v1457 = vpop.f32.mrb[0].mxu0
    %v1458 = vadd.f32 %v1386, %v1457
    %v1459 = vpop.f32.mrb[0].mxu0
    %v1460 = vadd.f32 %v1386, %v1459
    %1461 = vdwg.mxu0
    %1462 = vmatprep.subr.mxu0 0.0
    %1463 = vmatpush1.msra.mxu0 %v1372
    %1464 = vmatprep.subr.mxu0 0.0
    %1465 = vmatpush1.msra.mxu0 %v1375
    %1466 = vmatprep.subr.mxu0 0.0
    %1467 = vmatpush1.msra.mxu0 %v1378
    %1468 = vmatprep.subr.mxu0 0.0
    %1469 = vmatpush1.msra.mxu0 %v1381
    %1470 = vmatprep.subr.mxu0 0.0
    %1471 = vmatpush1.msra.mxu0 0.0
    %1472 = vmatprep.subr.mxu0 0.0
    %1473 = vmatpush1.msra.mxu0 0.0
    %1474 = vmatprep.subr.mxu0 0.0
    %1475 = vmatpush1.msra.mxu0 0.0
    %1476 = vmatprep.subr.mxu0 0.0
    %1477 = vmatpush1.msra.mxu0 0.0
    %1478 = vmatprep.subr.mxu0 0.0
    %1479 = vmatpush1.msra.mxu0 0.0
    %1480 = vmatprep.subr.mxu0 0.0
    %1481 = vmatpush1.msra.mxu0 0.0
    %1482 = vmatprep.subr.mxu0 0.0
    %1483 = vmatpush1.msra.mxu0 0.0
    %1484 = vmatprep.subr.mxu0 0.0
    %1485 = vmatpush1.msra.mxu0 0.0
    %1486 = vmatprep.subr.mxu0 0.0
    %1487 = vmatpush1.msra.mxu0 0.0
    %1488 = vmatprep.subr.mxu0 0.0
    %1489 = vmatpush1.msra.mxu0 0.0
    %1490 = vmatprep.subr.mxu0 0.0
    %1491 = vmatpush1.msra.mxu0 0.0
    %1492 = vmatprep.subr.mxu0 0.0
    %1493 = vmatpush1.msra.mxu0 0.0
    %1494 = vmatprep.subr.mxu0 0.0
    %1495 = vmatpush1.msra.mxu0 0.0
    %1496 = vmatprep.subr.mxu0 0.0
    %1497 = vmatpush1.msra.mxu0 0.0
    %1498 = vmatprep.subr.mxu0 0.0
    %1499 = vmatpush1.msra.mxu0 0.0
    %1500 = vmatprep.subr.mxu0 0.0
    %1501 = vmatpush1.msra.mxu0 0.0
    %1502 = vmatprep.subr.mxu0 0.0
    %1503 = vmatpush1.msra.mxu0 0.0
    %1504 = vmatprep.subr.mxu0 0.0
    %1505 = vmatpush1.msra.mxu0 0.0
    %1506 = vmatprep.subr.mxu0 0.0
    %1507 = vmatpush1.msra.mxu0 0.0
    %1508 = vmatprep.subr.mxu0 0.0
    %1509 = vmatpush1.msra.mxu0 0.0
    %1510 = vmatprep.subr.mxu0 0.0
    %1511 = vmatpush1.msra.mxu0 0.0
    %1512 = vmatprep.subr.mxu0 0.0
    %1513 = vmatpush1.msra.mxu0 0.0
    %1514 = vmatprep.subr.mxu0 0.0
    %1515 = vmatpush1.msra.mxu0 0.0
    %1516 = vmatprep.subr.mxu0 0.0
    %1517 = vmatpush1.msra.mxu0 0.0
    %1518 = vmatprep.subr.mxu0 0.0
    %1519 = vmatpush1.msra.mxu0 0.0
    %1520 = vmatprep.subr.mxu0 0.0
    %1521 = vmatpush1.msra.mxu0 0.0
    %1522 = vmatprep.subr.mxu0 0.0
    %1523 = vmatpush1.msra.mxu0 0.0
    %1524 = vmatprep.subr.mxu0 0.0
    %1525 = vmatpush1.msra.mxu0 0.0
    %1526 = vmatprep.mubr.f32.mxu0 0.0
    %1527 = vmatmul.mubr.f32.gmra.mrb[0].mxu0 %v1389
    %v1528 = vpop.f32.mrb[0].mxu0
    %v1529 = vadd.f32 %v1386, %v1528
    %v1530 = vpop.f32.mrb[0].mxu0
    %1531 = vdwg.mxu0
    %v1535 = vcombine.low %v1458, %v1460
    %v1537 = vunpack.c.l.s4 1966171168
    %v1538 = vunpack.c.0.s8 %v1537
    %v1539 = vlaneseq
    %v1540 = vshrl.u32 %v1539, 7
    %v1541 = vsub.s32 %v1538, %v1540
    %v1542 = vrot.slane %v1535, %v1541
    %v1544 = vunpack.c.l.s4 1966171168
    %v1545 = vunpack.c.0.s8 %v1544
    %v1546 = vlaneseq
    %v1547 = vshrl.u32 %v1546, 7
    %v1548 = vsub.s32 %v1545, %v1547
    %v1549 = vrot.slane %v1529, %v1548
    %v1550 = vcombine.low %v1542, %v1549
    %v1552 = vunpack.c.l.s4 1966171168
    %v1553 = vunpack.c.0.s8 %v1552
    %v1554 = vlaneseq
    %v1555 = vshrl.u32 %v1554, 7
    %v1556 = vsub.s32 %v1553, %v1555
    %v1557 = vrot.slane %v1550, %v1556
    %v1559 = vlaneseq
    %vm1560 = vcmp.ge.s32.totalorder %v1559, 0
    %vm1561 = vcmp.lt.s32.totalorder %v1559, 300
    %vm1562 = vmand %vm1560, %vm1561
    %1563 = vst.msk [vmem:[#allocation8] sm:$0x7] %vm1562, %v1557
    // Predicated region
    $region46: #{tpu_custom_call.1} parent=1 // pred_check
      _
    $region47: #{tpu_custom_call.1} parent=1 // pred_check_branch
      %1565 = sbr.rel (0) target = $region49
    $region48: #{tpu_custom_call.1} parent=1 // pred_region
      %s1567 = ssub.s32 48, 48
      %1568 = vsyncadd [#allocation4], %s1567
      %s1570 = sshll.u32 [#allocation8], 4
      %s1571 = int_to_ptr.vmem [resolvable:$true] %s1570
      %1573 = dma.vmem_to_hbm [thread:$0]  %s1571, 48, %s8, [#allocation4]
    $region49: #{tpu_custom_call.1} parent=1 // pred_fallthru
      _
    // Predicated region
    $region50: #{tpu_custom_call.1} parent=1 // pred_check
      _
    $region51: #{tpu_custom_call.1} parent=1 // pred_check_branch
      %1575 = sbr.rel (0) target = $region53
    $region52: #{tpu_custom_call.1} parent=1 // pred_region
      %1576 = dma.done [#allocation4], 48
    $region53: #{tpu_custom_call.1} parent=1 // pred_fallthru
      _
    %1577 = vsyncpa [#allocation3], 1
    %1578 = vsyncpa [#allocation6], 1
    %1579 = vsyncpa [#allocation4], 1

</llo_original>
